<compile_context>
chip_gen: v7x
topology: tpu7x:2x2x1
jax: 0.10.0
libtpu: 0.0.40
codegen_flags: <defaults>
</compile_context>

<pallas_src>
import functools
import math

import jax
import jax.numpy as jnp
from jax.experimental import pallas as pl
from jax.experimental.pallas import tpu as pltpu


def _cross_attention_kernel(q_ref, k_ref, v_ref,
                            wq_ref, wk_ref, wv_ref, wo_ref,
                            bq_ref, bk_ref, bv_ref, bo_ref,
                            out_ref, *attn_refs, n_heads, scale):
    """One (Bb, Tq, D) batch block per grid step.

    q_ref   : (Bb, Tq, D) f32   query rows for this batch block
    k_ref   : (Bb, Tk, D) f32   key rows
    v_ref   : (Bb, Tk, D) f32   value rows
    w*_ref  : (D, D)      bf16  fused projection weights (already transposed: x @ W)
    b*_ref  : (1, D)      f32   fused biases
    out_ref : (Bb, Tq, D) f32   final output (fused out_proj + output Linear)
    attn_refs: optionally one (Bb, Tq, Tk) f32 ref with head-averaged attention weights
    """
    Bb, Tq, D = q_ref.shape
    Tk = k_ref.shape[1]
    dh = D // n_heads
    bf16 = jnp.bfloat16
    f32 = jnp.float32

    # Flatten batch*time (leading-dim reshapes only; lane dim D untouched) so each
    # projection is ONE (Bb*T, D) @ (D, D) MXU matmul with bf16 operands, f32 accum.
    q2 = q_ref[...].reshape(Bb * Tq, D).astype(bf16)
    k2 = k_ref[...].reshape(Bb * Tk, D).astype(bf16)
    v2 = v_ref[...].reshape(Bb * Tk, D).astype(bf16)

    Q = (jnp.dot(q2, wq_ref[...], preferred_element_type=f32)
         + bq_ref[...]).reshape(Bb, Tq, D)
    K = (jnp.dot(k2, wk_ref[...], preferred_element_type=f32)
         + bk_ref[...]).reshape(Bb, Tk, D)
    V = (jnp.dot(v2, wv_ref[...], preferred_element_type=f32)
         + bv_ref[...]).reshape(Bb, Tk, D)

    ctx_parts = []
    attn_sum = None
    # Static unroll over heads (n_heads is small); per-head slices are compile-time
    # constant.  Only the tiny attention-weight average is accumulated here — the
    # output projection is done once, after re-assembling the full-width context.
    for h in range(n_heads):
        lo = h * dh
        qh = Q[:, :, lo:lo + dh].astype(bf16)          # (Bb, Tq, dh)
        kh = K[:, :, lo:lo + dh].astype(bf16)          # (Bb, Tk, dh)
        vh = V[:, :, lo:lo + dh].astype(bf16)          # (Bb, Tk, dh)

        s = jnp.einsum('bqe,bke->bqk', qh, kh,
                       preferred_element_type=f32) * scale       # (Bb, Tq, Tk) f32
        s = s - jnp.max(s, axis=-1, keepdims=True)
        e = jnp.exp(s)
        # EUP reciprocal keeps the divide off the VALU slot.
        p = e * pl.reciprocal(jnp.sum(e, axis=-1, keepdims=True), approx=True)

        ctx_parts.append(jnp.einsum('bqk,bke->bqe', p.astype(bf16), vh,
                                    preferred_element_type=f32))  # (Bb, Tq, dh)
        if attn_refs:
            attn_sum = p if attn_sum is None else attn_sum + p

    # Re-assemble heads on the lane axis and run ONE (Bb*Tq, D) @ (D, D) output
    # projection (MHA out_proj ∘ output Linear, fused in the wrapper).
    ctx = jnp.concatenate(ctx_parts, axis=-1)                     # (Bb, Tq, D) f32
    ctx2 = ctx.reshape(Bb * Tq, D).astype(bf16)
    out = jnp.dot(ctx2, wo_ref[...], preferred_element_type=f32) + bo_ref[...]
    out_ref[...] = out.reshape(Bb, Tq, D).astype(out_ref.dtype)

    if attn_refs:
        attn_refs[0][...] = (attn_sum * (1.0 / n_heads)).astype(attn_refs[0].dtype)


def cross_attention_forward(query, key, value, params, n_heads, *,
                            need_weights=True, batch_block=None):
    """query: (B, Tq, D), key/value: (B, Tk, D). Returns (output, attn_weights|None)."""
    B, Tq, D = query.shape
    _, Tk, _ = key.shape
    assert D % n_heads == 0
    d_head = D // n_heads
    scale = 1.0 / math.sqrt(d_head)
    f32, bf16 = jnp.float32, jnp.bfloat16

    if batch_block is None:
        # Keep >= 2 grid steps when possible so v7x's two TensorCores both get work
        # under dimension_semantics=("parallel",); otherwise pack the whole batch.
        batch_block = B // 2 if (B >= 2 and B % 2 == 0) else 1
    assert B % batch_block == 0, "batch_block must divide batch size"
    grid = (B // batch_block,)

    wq, bq = params['wq'], params['bq']
    wk, bk = params['wk'], params['bk']
    wv, bv = params['wv'], params['bv']
    in_w, in_b = params['in_proj_w'], params['in_proj_b']
    wop, bop = params['out_proj_w'], params['out_proj_b']
    wo2, bo2 = params['w_out'], params['b_out']

    wqi, wki, wvi = in_w[0:D], in_w[D:2 * D], in_w[2 * D:3 * D]
    bqi, bki, bvi = in_b[0:D], in_b[D:2 * D], in_b[2 * D:3 * D]

    # Fuse chained Linears in the wrapper (mathematically identical):
    #   (x @ Wa^T + ba) @ Wb^T + bb  ==  x @ (Wa^T Wb^T) + (ba Wb^T + bb)
    # Products are formed in f32, then cast to bf16 for the MXU (halves weight DMA/VMEM).
    wq_eff = (wq.T @ wqi.T).astype(bf16)                    # (D, D)
    wk_eff = (wk.T @ wki.T).astype(bf16)
    wv_eff = (wv.T @ wvi.T).astype(bf16)
    wo_eff = (wop.T @ wo2.T).astype(bf16)                   # MHA out_proj ∘ output Linear
    bq_eff = (bq @ wqi.T + bqi).reshape(1, D).astype(f32)
    bk_eff = (bk @ wki.T + bki).reshape(1, D).astype(f32)
    bv_eff = (bv @ wvi.T + bvi).reshape(1, D).astype(f32)
    bo_eff = (bop @ wo2.T + bo2).reshape(1, D).astype(f32)

    query = query.astype(f32)
    key = key.astype(f32)
    value = value.astype(f32)

    flops = B * (2 * Tq * D * D            # Q projection
                 + 2 * 2 * Tk * D * D      # K, V projections
                 + 2 * Tq * Tk * D         # scores (all heads)
                 + 2 * Tq * Tk * D         # context (all heads)
                 + 2 * Tq * D * D)         # fused output projection
    transcendentals = B * n_heads * Tq * Tk
    bytes_accessed = (4 * B * (2 * Tq * D + 2 * Tk * D)     # f32 activations in/out
                      + (4 * B * Tq * Tk if need_weights else 0)
                      + 2 * 4 * D * D                        # bf16 weights
                      + 4 * 4 * D)                           # f32 biases

    kernel = functools.partial(_cross_attention_kernel,
                               n_heads=n_heads, scale=scale)

    out_shapes = [jax.ShapeDtypeStruct((B, Tq, D), f32)]
    out_specs = [pl.BlockSpec((batch_block, Tq, D), lambda b: (b, 0, 0))]
    if need_weights:
        # TODO(synk): attention-weight writeback is lane-sparse when Tk < 128; callers
        # that don't need the weights should pass need_weights=False to skip it.
        out_shapes.append(jax.ShapeDtypeStruct((B, Tq, Tk), f32))
        out_specs.append(pl.BlockSpec((batch_block, Tq, Tk), lambda b: (b, 0, 0)))

    results = pl.pallas_call(
        kernel,
        out_shape=tuple(out_shapes),
        grid_spec=pltpu.PrefetchScalarGridSpec(
            num_scalar_prefetch=0,
            grid=grid,
            in_specs=[
                pl.BlockSpec((batch_block, Tq, D), lambda b: (b, 0, 0)),  # query
                pl.BlockSpec((batch_block, Tk, D), lambda b: (b, 0, 0)),  # key
                pl.BlockSpec((batch_block, Tk, D), lambda b: (b, 0, 0)),  # value
                pl.BlockSpec((D, D), lambda b: (0, 0)),                   # wq_eff
                pl.BlockSpec((D, D), lambda b: (0, 0)),                   # wk_eff
                pl.BlockSpec((D, D), lambda b: (0, 0)),                   # wv_eff
                pl.BlockSpec((D, D), lambda b: (0, 0)),                   # wo_eff
                pl.BlockSpec((1, D), lambda b: (0, 0)),                   # bq_eff
                pl.BlockSpec((1, D), lambda b: (0, 0)),                   # bk_eff
                pl.BlockSpec((1, D), lambda b: (0, 0)),                   # bv_eff
                pl.BlockSpec((1, D), lambda b: (0, 0)),                   # bo_eff
            ],
            out_specs=tuple(out_specs),
        ),
        compiler_params=pltpu.CompilerParams(
            dimension_semantics=("parallel",),        # batch blocks split across TCs
            vmem_limit_bytes=32 * 1024 * 1024,        # safe on v5e/v6e/v7x at these sizes
        ),
        cost_estimate=pl.CostEstimate(flops=flops,
                                      transcendentals=transcendentals,
                                      bytes_accessed=bytes_accessed),
    )(query, key, value,
      wq_eff, wk_eff, wv_eff, wo_eff,
      bq_eff, bk_eff, bv_eff, bo_eff)

    if need_weights:
        return results[0], results[1]
    return results[0], None


def init_cross_attention_params(key, d_model):
    """Deterministic synthetic params matching the PyTorch parameter shapes."""
    bound = 1.0 / math.sqrt(d_model)
    ks = jax.random.split(key, 12)

    def u(k, shape):
        return jax.random.uniform(k, shape, jnp.float32, -bound, bound)

    return dict(
        wq=u(ks[0], (d_model, d_model)), bq=u(ks[1], (d_model,)),
        wk=u(ks[2], (d_model, d_model)), bk=u(ks[3], (d_model,)),
        wv=u(ks[4], (d_model, d_model)), bv=u(ks[5], (d_model,)),
        in_proj_w=u(ks[6], (3 * d_model, d_model)),
        in_proj_b=u(ks[7], (3 * d_model,)),
        out_proj_w=u(ks[8], (d_model, d_model)), out_proj_b=u(ks[9], (d_model,)),
        w_out=u(ks[10], (d_model, d_model)), b_out=u(ks[11], (d_model,)),
    )


def cross_attention_reference(query, key, value, p, n_heads):
    """Pure-JAX f32 reference with the unfused (PyTorch-shaped) computation."""
    B, Tq, D = query.shape
    Tk = key.shape[1]
    dh = D // n_heads
    Q1 = query @ p['wq'].T + p['bq']
    K1 = key @ p['wk'].T + p['bk']
    V1 = value @ p['wv'].T + p['bv']
    wqi, wki, wvi = jnp.split(p['in_proj_w'], 3, axis=0)
    bqi, bki, bvi = jnp.split(p['in_proj_b'], 3, axis=0)
    Q2 = Q1 @ wqi.T + bqi
    K2 = K1 @ wki.T + bki
    V2 = V1 @ wvi.T + bvi
    qh = Q2.reshape(B, Tq, n_heads, dh).transpose(0, 2, 1, 3)
    kh = K2.reshape(B, Tk, n_heads, dh).transpose(0, 2, 1, 3)
    vh = V2.reshape(B, Tk, n_heads, dh).transpose(0, 2, 1, 3)
    s = jnp.einsum('bhqd,bhkd->bhqk', qh, kh) / math.sqrt(dh)
    a = jax.nn.softmax(s, axis=-1)
    ctx = jnp.einsum('bhqk,bhkd->bhqd', a, vh)
    ctx = ctx.transpose(0, 2, 1, 3).reshape(B, Tq, D)
    attn_out = ctx @ p['out_proj_w'].T + p['out_proj_b']
    out = attn_out @ p['w_out'].T + p['b_out']
    return out, a.mean(axis=1)


if __name__ == "__main__":
    B, Tq, Tk, d_model, n_heads = 2, 8, 8, 32, 4

    root = jax.random.PRNGKey(0)
    root, kq, kk, kv, kp = jax.random.split(root, 5)
    query = jax.random.normal(kq, (B, Tq, d_model), dtype=jnp.float32)
    key = jax.random.normal(kk, (B, Tk, d_model), dtype=jnp.float32)
    value = jax.random.normal(kv, (B, Tk, d_model), dtype=jnp.float32)
    params = init_cross_attention_params(kp, d_model)

    out, attn = cross_attention_forward(query, key, value, params, n_heads)
    out, attn = jax.block_until_ready((out, attn))

    assert out.shape == (B, Tq, d_model), out.shape
    assert attn.shape == (B, Tq, Tk), attn.shape
    assert bool(jnp.all(jnp.isfinite(out)))
    assert bool(jnp.all(jnp.isfinite(attn)))
    # softmax rows must sum to ~1 after head averaging (approx EUP reciprocal in use)
    assert bool(jnp.allclose(jnp.sum(attn, axis=-1), 1.0, atol=1e-2))

    # loose numerical check against an unfused pure-JAX f32 reference
    # (bf16 MXU operands + fused weights change rounding slightly)
    ref_out, ref_attn = cross_attention_reference(query, key, value, params, n_heads)
    assert float(jnp.max(jnp.abs(out - ref_out))) < 5e-2
    assert float(jnp.max(jnp.abs(attn - ref_attn))) < 5e-2

    print("KERNEL_OK")
</pallas_src>

<mosaic_0001>
module attributes {stable_mosaic.version = 11 : i64} {
  func.func @_cross_attention_kernel(%arg0: i32, %arg1: memref<1x8x32xf32, #tpu.memory_space<vmem>>, %arg2: memref<1x8x32xf32, #tpu.memory_space<vmem>>, %arg3: memref<1x8x32xf32, #tpu.memory_space<vmem>>, %arg4: memref<32x32xbf16, #tpu.memory_space<vmem>>, %arg5: memref<32x32xbf16, #tpu.memory_space<vmem>>, %arg6: memref<32x32xbf16, #tpu.memory_space<vmem>>, %arg7: memref<32x32xbf16, #tpu.memory_space<vmem>>, %arg8: memref<1x32xf32, #tpu.memory_space<vmem>>, %arg9: memref<1x32xf32, #tpu.memory_space<vmem>>, %arg10: memref<1x32xf32, #tpu.memory_space<vmem>>, %arg11: memref<1x32xf32, #tpu.memory_space<vmem>>, %arg12: memref<1x8x32xf32, #tpu.memory_space<vmem>>, %arg13: memref<1x8x8xf32, #tpu.memory_space<vmem>>) attributes {dimension_semantics = [#tpu.dimension_semantics<parallel>], iteration_bounds = array<i64: 2>, scalar_prefetch = 0 : i64, scratch_operands = 0 : i64, tpu.core_type = #tpu.core_type<tc>, window_params = [{transform_indices = @transform_0, window_bounds = array<i64: 1, 8, 32>}, {transform_indices = @transform_1, window_bounds = array<i64: 1, 8, 32>}, {transform_indices = @transform_2, window_bounds = array<i64: 1, 8, 32>}, {pipeline_mode = #tpu.pipeline_mode<synchronous>, transform_indices = @transform_3, window_bounds = array<i64: 32, 32>}, {pipeline_mode = #tpu.pipeline_mode<synchronous>, transform_indices = @transform_4, window_bounds = array<i64: 32, 32>}, {pipeline_mode = #tpu.pipeline_mode<synchronous>, transform_indices = @transform_5, window_bounds = array<i64: 32, 32>}, {pipeline_mode = #tpu.pipeline_mode<synchronous>, transform_indices = @transform_6, window_bounds = array<i64: 32, 32>}, {pipeline_mode = #tpu.pipeline_mode<synchronous>, transform_indices = @transform_7, window_bounds = array<i64: 1, 32>}, {pipeline_mode = #tpu.pipeline_mode<synchronous>, transform_indices = @transform_8, window_bounds = array<i64: 1, 32>}, {pipeline_mode = #tpu.pipeline_mode<synchronous>, transform_indices = @transform_9, window_bounds = array<i64: 1, 32>}, {pipeline_mode = #tpu.pipeline_mode<synchronous>, transform_indices = @transform_10, window_bounds = array<i64: 1, 32>}, {transform_indices = @transform_11, window_bounds = array<i64: 1, 8, 32>}, {transform_indices = @transform_12, window_bounds = array<i64: 1, 8, 8>}]} {
    %c0 = arith.constant 0 : index
    %c0_0 = arith.constant 0 : index
    %c0_1 = arith.constant 0 : index
    %0 = vector.load %arg1[%c0, %c0_0, %c0_1] : memref<1x8x32xf32, #tpu.memory_space<vmem>>, vector<1x8x32xf32>
    %1 = vector.shape_cast %0 : vector<1x8x32xf32> to vector<8x32xf32>
    %2 = arith.truncf %1 : vector<8x32xf32> to vector<8x32xbf16>
    %c0_2 = arith.constant 0 : index
    %c0_3 = arith.constant 0 : index
    %c0_4 = arith.constant 0 : index
    %3 = vector.load %arg2[%c0_2, %c0_3, %c0_4] : memref<1x8x32xf32, #tpu.memory_space<vmem>>, vector<1x8x32xf32>
    %4 = vector.shape_cast %3 : vector<1x8x32xf32> to vector<8x32xf32>
    %5 = arith.truncf %4 : vector<8x32xf32> to vector<8x32xbf16>
    %c0_5 = arith.constant 0 : index
    %c0_6 = arith.constant 0 : index
    %c0_7 = arith.constant 0 : index
    %6 = vector.load %arg3[%c0_5, %c0_6, %c0_7] : memref<1x8x32xf32, #tpu.memory_space<vmem>>, vector<1x8x32xf32>
    %7 = vector.shape_cast %6 : vector<1x8x32xf32> to vector<8x32xf32>
    %8 = arith.truncf %7 : vector<8x32xf32> to vector<8x32xbf16>
    %c0_8 = arith.constant 0 : index
    %c0_9 = arith.constant 0 : index
    %9 = vector.load %arg4[%c0_8, %c0_9] : memref<32x32xbf16, #tpu.memory_space<vmem>>, vector<32x32xbf16>
    %cst = arith.constant dense<0.000000e+00> : vector<8x32xf32>
    %10 = tpu.matmul %2, %9, %cst {dimension_numbers = #tpu.dot_dimension_numbers<[1], [0], [0], [1], [0, 0, 1, 1], [], []>} : vector<8x32xbf16>, vector<32x32xbf16>, vector<8x32xf32> -> vector<8x32xf32>
    %c0_10 = arith.constant 0 : index
    %c0_11 = arith.constant 0 : index
    %11 = vector.load %arg8[%c0_10, %c0_11] : memref<1x32xf32, #tpu.memory_space<vmem>>, vector<1x32xf32>
    %12 = vector.broadcast %11 : vector<1x32xf32> to vector<8x32xf32>
    %13 = arith.addf %10, %12 : vector<8x32xf32>
    %14 = vector.shape_cast %13 : vector<8x32xf32> to vector<1x8x32xf32>
    %c0_12 = arith.constant 0 : index
    %c0_13 = arith.constant 0 : index
    %15 = vector.load %arg5[%c0_12, %c0_13] : memref<32x32xbf16, #tpu.memory_space<vmem>>, vector<32x32xbf16>
    %cst_14 = arith.constant dense<0.000000e+00> : vector<8x32xf32>
    %16 = tpu.matmul %5, %15, %cst_14 {dimension_numbers = #tpu.dot_dimension_numbers<[1], [0], [0], [1], [0, 0, 1, 1], [], []>} : vector<8x32xbf16>, vector<32x32xbf16>, vector<8x32xf32> -> vector<8x32xf32>
    %c0_15 = arith.constant 0 : index
    %c0_16 = arith.constant 0 : index
    %17 = vector.load %arg9[%c0_15, %c0_16] : memref<1x32xf32, #tpu.memory_space<vmem>>, vector<1x32xf32>
    %18 = vector.broadcast %17 : vector<1x32xf32> to vector<8x32xf32>
    %19 = arith.addf %16, %18 : vector<8x32xf32>
    %20 = vector.shape_cast %19 : vector<8x32xf32> to vector<1x8x32xf32>
    %c0_17 = arith.constant 0 : index
    %c0_18 = arith.constant 0 : index
    %21 = vector.load %arg6[%c0_17, %c0_18] : memref<32x32xbf16, #tpu.memory_space<vmem>>, vector<32x32xbf16>
    %cst_19 = arith.constant dense<0.000000e+00> : vector<8x32xf32>
    %22 = tpu.matmul %8, %21, %cst_19 {dimension_numbers = #tpu.dot_dimension_numbers<[1], [0], [0], [1], [0, 0, 1, 1], [], []>} : vector<8x32xbf16>, vector<32x32xbf16>, vector<8x32xf32> -> vector<8x32xf32>
    %c0_20 = arith.constant 0 : index
    %c0_21 = arith.constant 0 : index
    %23 = vector.load %arg10[%c0_20, %c0_21] : memref<1x32xf32, #tpu.memory_space<vmem>>, vector<1x32xf32>
    %24 = vector.broadcast %23 : vector<1x32xf32> to vector<8x32xf32>
    %25 = arith.addf %22, %24 : vector<8x32xf32>
    %26 = vector.shape_cast %25 : vector<8x32xf32> to vector<1x8x32xf32>
    %27 = vector.extract_strided_slice %14 {offsets = [0, 0, 0], sizes = [1, 8, 8], strides = [1, 1, 1]} : vector<1x8x32xf32> to vector<1x8x8xf32>
    %28 = arith.truncf %27 : vector<1x8x8xf32> to vector<1x8x8xbf16>
    %29 = vector.extract_strided_slice %20 {offsets = [0, 0, 0], sizes = [1, 8, 8], strides = [1, 1, 1]} : vector<1x8x32xf32> to vector<1x8x8xf32>
    %30 = arith.truncf %29 : vector<1x8x8xf32> to vector<1x8x8xbf16>
    %31 = vector.extract_strided_slice %26 {offsets = [0, 0, 0], sizes = [1, 8, 8], strides = [1, 1, 1]} : vector<1x8x32xf32> to vector<1x8x8xf32>
    %32 = arith.truncf %31 : vector<1x8x8xf32> to vector<1x8x8xbf16>
    "tpu.trace_start"() <{level = 10 : i32, message = "bqe,bke->bqk"}> : () -> ()
    %cst_22 = arith.constant dense<0.000000e+00> : vector<1x8x8xf32>
    %33 = tpu.matmul %28, %30, %cst_22 {dimension_numbers = #tpu.dot_dimension_numbers<[2], [2], [1], [1], [0, 0, 0, 1, 1, 1], [0], [0]>} : vector<1x8x8xbf16>, vector<1x8x8xbf16>, vector<1x8x8xf32> -> vector<1x8x8xf32>
    "tpu.trace_stop"() : () -> ()
    %cst_23 = arith.constant 0.353553385 : f32
    %34 = vector.broadcast %cst_23 : f32 to vector<1x8x8xf32>
    %35 = arith.mulf %33, %34 : vector<1x8x8xf32>
    %cst_24 = arith.constant dense<0xFF800000> : vector<1x8xf32>
    %36 = vector.multi_reduction <maximumf>, %35, %cst_24 [2] : vector<1x8x8xf32> to vector<1x8xf32>
    %37 = vector.shape_cast %36 : vector<1x8xf32> to vector<1x8x1xf32>
    %38 = vector.broadcast %37 : vector<1x8x1xf32> to vector<1x8x8xf32>
    %39 = arith.subf %35, %38 : vector<1x8x8xf32>
    %40 = math.exp %39 : vector<1x8x8xf32>
    %cst_25 = arith.constant dense<0.000000e+00> : vector<1x8xf32>
    %41 = vector.multi_reduction <add>, %40, %cst_25 [2] : vector<1x8x8xf32> to vector<1x8xf32>
    %42 = vector.shape_cast %41 : vector<1x8xf32> to vector<1x8x1xf32>
    %43 = tpu.reciprocal %42 {approx = true} : vector<1x8x1xf32> -> vector<1x8x1xf32>
    %44 = vector.broadcast %43 : vector<1x8x1xf32> to vector<1x8x8xf32>
    %45 = arith.mulf %40, %44 : vector<1x8x8xf32>
    %46 = arith.truncf %45 : vector<1x8x8xf32> to vector<1x8x8xbf16>
    "tpu.trace_start"() <{level = 10 : i32, message = "bqk,bke->bqe"}> : () -> ()
    %cst_26 = arith.constant dense<0.000000e+00> : vector<1x8x8xf32>
    %47 = tpu.matmul %46, %32, %cst_26 {dimension_numbers = #tpu.dot_dimension_numbers<[2], [1], [1], [2], [0, 0, 0, 1, 1, 2], [0], [0]>} : vector<1x8x8xbf16>, vector<1x8x8xbf16>, vector<1x8x8xf32> -> vector<1x8x8xf32>
    "tpu.trace_stop"() : () -> ()
    %48 = vector.extract_strided_slice %14 {offsets = [0, 0, 8], sizes = [1, 8, 8], strides = [1, 1, 1]} : vector<1x8x32xf32> to vector<1x8x8xf32>
    %49 = arith.truncf %48 : vector<1x8x8xf32> to vector<1x8x8xbf16>
    %50 = vector.extract_strided_slice %20 {offsets = [0, 0, 8], sizes = [1, 8, 8], strides = [1, 1, 1]} : vector<1x8x32xf32> to vector<1x8x8xf32>
    %51 = arith.truncf %50 : vector<1x8x8xf32> to vector<1x8x8xbf16>
    %52 = vector.extract_strided_slice %26 {offsets = [0, 0, 8], sizes = [1, 8, 8], strides = [1, 1, 1]} : vector<1x8x32xf32> to vector<1x8x8xf32>
    %53 = arith.truncf %52 : vector<1x8x8xf32> to vector<1x8x8xbf16>
    "tpu.trace_start"() <{level = 10 : i32, message = "bqe,bke->bqk"}> : () -> ()
    %cst_27 = arith.constant dense<0.000000e+00> : vector<1x8x8xf32>
    %54 = tpu.matmul %49, %51, %cst_27 {dimension_numbers = #tpu.dot_dimension_numbers<[2], [2], [1], [1], [0, 0, 0, 1, 1, 1], [0], [0]>} : vector<1x8x8xbf16>, vector<1x8x8xbf16>, vector<1x8x8xf32> -> vector<1x8x8xf32>
    "tpu.trace_stop"() : () -> ()
    %cst_28 = arith.constant 0.353553385 : f32
    %55 = vector.broadcast %cst_28 : f32 to vector<1x8x8xf32>
    %56 = arith.mulf %54, %55 : vector<1x8x8xf32>
    %cst_29 = arith.constant dense<0xFF800000> : vector<1x8xf32>
    %57 = vector.multi_reduction <maximumf>, %56, %cst_29 [2] : vector<1x8x8xf32> to vector<1x8xf32>
    %58 = vector.shape_cast %57 : vector<1x8xf32> to vector<1x8x1xf32>
    %59 = vector.broadcast %58 : vector<1x8x1xf32> to vector<1x8x8xf32>
    %60 = arith.subf %56, %59 : vector<1x8x8xf32>
    %61 = math.exp %60 : vector<1x8x8xf32>
    %cst_30 = arith.constant dense<0.000000e+00> : vector<1x8xf32>
    %62 = vector.multi_reduction <add>, %61, %cst_30 [2] : vector<1x8x8xf32> to vector<1x8xf32>
    %63 = vector.shape_cast %62 : vector<1x8xf32> to vector<1x8x1xf32>
    %64 = tpu.reciprocal %63 {approx = true} : vector<1x8x1xf32> -> vector<1x8x1xf32>
    %65 = vector.broadcast %64 : vector<1x8x1xf32> to vector<1x8x8xf32>
    %66 = arith.mulf %61, %65 : vector<1x8x8xf32>
    %67 = arith.truncf %66 : vector<1x8x8xf32> to vector<1x8x8xbf16>
    "tpu.trace_start"() <{level = 10 : i32, message = "bqk,bke->bqe"}> : () -> ()
    %cst_31 = arith.constant dense<0.000000e+00> : vector<1x8x8xf32>
    %68 = tpu.matmul %67, %53, %cst_31 {dimension_numbers = #tpu.dot_dimension_numbers<[2], [1], [1], [2], [0, 0, 0, 1, 1, 2], [0], [0]>} : vector<1x8x8xbf16>, vector<1x8x8xbf16>, vector<1x8x8xf32> -> vector<1x8x8xf32>
    "tpu.trace_stop"() : () -> ()
    %69 = arith.addf %45, %66 : vector<1x8x8xf32>
    %70 = vector.extract_strided_slice %14 {offsets = [0, 0, 16], sizes = [1, 8, 8], strides = [1, 1, 1]} : vector<1x8x32xf32> to vector<1x8x8xf32>
    %71 = arith.truncf %70 : vector<1x8x8xf32> to vector<1x8x8xbf16>
    %72 = vector.extract_strided_slice %20 {offsets = [0, 0, 16], sizes = [1, 8, 8], strides = [1, 1, 1]} : vector<1x8x32xf32> to vector<1x8x8xf32>
    %73 = arith.truncf %72 : vector<1x8x8xf32> to vector<1x8x8xbf16>
    %74 = vector.extract_strided_slice %26 {offsets = [0, 0, 16], sizes = [1, 8, 8], strides = [1, 1, 1]} : vector<1x8x32xf32> to vector<1x8x8xf32>
    %75 = arith.truncf %74 : vector<1x8x8xf32> to vector<1x8x8xbf16>
    "tpu.trace_start"() <{level = 10 : i32, message = "bqe,bke->bqk"}> : () -> ()
    %cst_32 = arith.constant dense<0.000000e+00> : vector<1x8x8xf32>
    %76 = tpu.matmul %71, %73, %cst_32 {dimension_numbers = #tpu.dot_dimension_numbers<[2], [2], [1], [1], [0, 0, 0, 1, 1, 1], [0], [0]>} : vector<1x8x8xbf16>, vector<1x8x8xbf16>, vector<1x8x8xf32> -> vector<1x8x8xf32>
    "tpu.trace_stop"() : () -> ()
    %cst_33 = arith.constant 0.353553385 : f32
    %77 = vector.broadcast %cst_33 : f32 to vector<1x8x8xf32>
    %78 = arith.mulf %76, %77 : vector<1x8x8xf32>
    %cst_34 = arith.constant dense<0xFF800000> : vector<1x8xf32>
    %79 = vector.multi_reduction <maximumf>, %78, %cst_34 [2] : vector<1x8x8xf32> to vector<1x8xf32>
    %80 = vector.shape_cast %79 : vector<1x8xf32> to vector<1x8x1xf32>
    %81 = vector.broadcast %80 : vector<1x8x1xf32> to vector<1x8x8xf32>
    %82 = arith.subf %78, %81 : vector<1x8x8xf32>
    %83 = math.exp %82 : vector<1x8x8xf32>
    %cst_35 = arith.constant dense<0.000000e+00> : vector<1x8xf32>
    %84 = vector.multi_reduction <add>, %83, %cst_35 [2] : vector<1x8x8xf32> to vector<1x8xf32>
    %85 = vector.shape_cast %84 : vector<1x8xf32> to vector<1x8x1xf32>
    %86 = tpu.reciprocal %85 {approx = true} : vector<1x8x1xf32> -> vector<1x8x1xf32>
    %87 = vector.broadcast %86 : vector<1x8x1xf32> to vector<1x8x8xf32>
    %88 = arith.mulf %83, %87 : vector<1x8x8xf32>
    %89 = arith.truncf %88 : vector<1x8x8xf32> to vector<1x8x8xbf16>
    "tpu.trace_start"() <{level = 10 : i32, message = "bqk,bke->bqe"}> : () -> ()
    %cst_36 = arith.constant dense<0.000000e+00> : vector<1x8x8xf32>
    %90 = tpu.matmul %89, %75, %cst_36 {dimension_numbers = #tpu.dot_dimension_numbers<[2], [1], [1], [2], [0, 0, 0, 1, 1, 2], [0], [0]>} : vector<1x8x8xbf16>, vector<1x8x8xbf16>, vector<1x8x8xf32> -> vector<1x8x8xf32>
    "tpu.trace_stop"() : () -> ()
    %91 = arith.addf %69, %88 : vector<1x8x8xf32>
    %92 = vector.extract_strided_slice %14 {offsets = [0, 0, 24], sizes = [1, 8, 8], strides = [1, 1, 1]} : vector<1x8x32xf32> to vector<1x8x8xf32>
    %93 = arith.truncf %92 : vector<1x8x8xf32> to vector<1x8x8xbf16>
    %94 = vector.extract_strided_slice %20 {offsets = [0, 0, 24], sizes = [1, 8, 8], strides = [1, 1, 1]} : vector<1x8x32xf32> to vector<1x8x8xf32>
    %95 = arith.truncf %94 : vector<1x8x8xf32> to vector<1x8x8xbf16>
    %96 = vector.extract_strided_slice %26 {offsets = [0, 0, 24], sizes = [1, 8, 8], strides = [1, 1, 1]} : vector<1x8x32xf32> to vector<1x8x8xf32>
    %97 = arith.truncf %96 : vector<1x8x8xf32> to vector<1x8x8xbf16>
    "tpu.trace_start"() <{level = 10 : i32, message = "bqe,bke->bqk"}> : () -> ()
    %cst_37 = arith.constant dense<0.000000e+00> : vector<1x8x8xf32>
    %98 = tpu.matmul %93, %95, %cst_37 {dimension_numbers = #tpu.dot_dimension_numbers<[2], [2], [1], [1], [0, 0, 0, 1, 1, 1], [0], [0]>} : vector<1x8x8xbf16>, vector<1x8x8xbf16>, vector<1x8x8xf32> -> vector<1x8x8xf32>
    "tpu.trace_stop"() : () -> ()
    %cst_38 = arith.constant 0.353553385 : f32
    %99 = vector.broadcast %cst_38 : f32 to vector<1x8x8xf32>
    %100 = arith.mulf %98, %99 : vector<1x8x8xf32>
    %cst_39 = arith.constant dense<0xFF800000> : vector<1x8xf32>
    %101 = vector.multi_reduction <maximumf>, %100, %cst_39 [2] : vector<1x8x8xf32> to vector<1x8xf32>
    %102 = vector.shape_cast %101 : vector<1x8xf32> to vector<1x8x1xf32>
    %103 = vector.broadcast %102 : vector<1x8x1xf32> to vector<1x8x8xf32>
    %104 = arith.subf %100, %103 : vector<1x8x8xf32>
    %105 = math.exp %104 : vector<1x8x8xf32>
    %cst_40 = arith.constant dense<0.000000e+00> : vector<1x8xf32>
    %106 = vector.multi_reduction <add>, %105, %cst_40 [2] : vector<1x8x8xf32> to vector<1x8xf32>
    %107 = vector.shape_cast %106 : vector<1x8xf32> to vector<1x8x1xf32>
    %108 = tpu.reciprocal %107 {approx = true} : vector<1x8x1xf32> -> vector<1x8x1xf32>
    %109 = vector.broadcast %108 : vector<1x8x1xf32> to vector<1x8x8xf32>
    %110 = arith.mulf %105, %109 : vector<1x8x8xf32>
    %111 = arith.truncf %110 : vector<1x8x8xf32> to vector<1x8x8xbf16>
    "tpu.trace_start"() <{level = 10 : i32, message = "bqk,bke->bqe"}> : () -> ()
    %cst_41 = arith.constant dense<0.000000e+00> : vector<1x8x8xf32>
    %112 = tpu.matmul %111, %97, %cst_41 {dimension_numbers = #tpu.dot_dimension_numbers<[2], [1], [1], [2], [0, 0, 0, 1, 1, 2], [0], [0]>} : vector<1x8x8xbf16>, vector<1x8x8xbf16>, vector<1x8x8xf32> -> vector<1x8x8xf32>
    "tpu.trace_stop"() : () -> ()
    %113 = arith.addf %91, %110 : vector<1x8x8xf32>
    %114 = tpu.concatenate %47, %68, %90, %112 in 2 : vector<1x8x8xf32>, vector<1x8x8xf32>, vector<1x8x8xf32>, vector<1x8x8xf32> -> vector<1x8x32xf32>
    %115 = vector.shape_cast %114 : vector<1x8x32xf32> to vector<8x32xf32>
    %116 = arith.truncf %115 : vector<8x32xf32> to vector<8x32xbf16>
    %c0_42 = arith.constant 0 : index
    %c0_43 = arith.constant 0 : index
    %117 = vector.load %arg7[%c0_42, %c0_43] : memref<32x32xbf16, #tpu.memory_space<vmem>>, vector<32x32xbf16>
    %cst_44 = arith.constant dense<0.000000e+00> : vector<8x32xf32>
    %118 = tpu.matmul %116, %117, %cst_44 {dimension_numbers = #tpu.dot_dimension_numbers<[1], [0], [0], [1], [0, 0, 1, 1], [], []>} : vector<8x32xbf16>, vector<32x32xbf16>, vector<8x32xf32> -> vector<8x32xf32>
    %c0_45 = arith.constant 0 : index
    %c0_46 = arith.constant 0 : index
    %119 = vector.load %arg11[%c0_45, %c0_46] : memref<1x32xf32, #tpu.memory_space<vmem>>, vector<1x32xf32>
    %120 = vector.broadcast %119 : vector<1x32xf32> to vector<8x32xf32>
    %121 = arith.addf %118, %120 : vector<8x32xf32>
    %122 = vector.shape_cast %121 : vector<8x32xf32> to vector<1x8x32xf32>
    %c0_47 = arith.constant 0 : index
    %c0_48 = arith.constant 0 : index
    %c0_49 = arith.constant 0 : index
    %123 = vector.load %arg12[%c0_47, %c0_48, %c0_49] : memref<1x8x32xf32, #tpu.memory_space<vmem>>, vector<1x8x32xf32>
    tpu.vector_store %arg12[%c0_47, %c0_48, %c0_49], %122 {strides = array<i32>} : memref<1x8x32xf32, #tpu.memory_space<vmem>>, vector<1x8x32xf32>,
    %cst_50 = arith.constant 2.500000e-01 : f32
    %124 = vector.broadcast %cst_50 : f32 to vector<1x8x8xf32>
    %125 = arith.mulf %113, %124 : vector<1x8x8xf32>
    %c0_51 = arith.constant 0 : index
    %c0_52 = arith.constant 0 : index
    %c0_53 = arith.constant 0 : index
    %126 = vector.load %arg13[%c0_51, %c0_52, %c0_53] : memref<1x8x8xf32, #tpu.memory_space<vmem>>, vector<1x8x8xf32>
    tpu.vector_store %arg13[%c0_51, %c0_52, %c0_53], %125 {strides = array<i32>} : memref<1x8x8xf32, #tpu.memory_space<vmem>>, vector<1x8x8xf32>,
    return
  }
  func.func @transform_0(%arg0: i32) -> (i32, i32, i32) {
    %c0_i32 = arith.constant 0 : i32
    %c0_i32_0 = arith.constant 0 : i32
    %c0_i32_1 = arith.constant 0 : i32
    return %arg0, %c0_i32, %c0_i32_0 : i32, i32, i32
  }
  func.func @transform_1(%arg0: i32) -> (i32, i32, i32) {
    %c0_i32 = arith.constant 0 : i32
    %c0_i32_0 = arith.constant 0 : i32
    %c0_i32_1 = arith.constant 0 : i32
    return %arg0, %c0_i32, %c0_i32_0 : i32, i32, i32
  }
  func.func @transform_2(%arg0: i32) -> (i32, i32, i32) {
    %c0_i32 = arith.constant 0 : i32
    %c0_i32_0 = arith.constant 0 : i32
    %c0_i32_1 = arith.constant 0 : i32
    return %arg0, %c0_i32, %c0_i32_0 : i32, i32, i32
  }
  func.func @transform_3(%arg0: i32) -> (i32, i32) {
    %c0_i32 = arith.constant 0 : i32
    %c0_i32_0 = arith.constant 0 : i32
    %c0_i32_1 = arith.constant 0 : i32
    return %c0_i32, %c0_i32_0 : i32, i32
  }
  func.func @transform_4(%arg0: i32) -> (i32, i32) {
    %c0_i32 = arith.constant 0 : i32
    %c0_i32_0 = arith.constant 0 : i32
    %c0_i32_1 = arith.constant 0 : i32
    return %c0_i32, %c0_i32_0 : i32, i32
  }
  func.func @transform_5(%arg0: i32) -> (i32, i32) {
    %c0_i32 = arith.constant 0 : i32
    %c0_i32_0 = arith.constant 0 : i32
    %c0_i32_1 = arith.constant 0 : i32
    return %c0_i32, %c0_i32_0 : i32, i32
  }
  func.func @transform_6(%arg0: i32) -> (i32, i32) {
    %c0_i32 = arith.constant 0 : i32
    %c0_i32_0 = arith.constant 0 : i32
    %c0_i32_1 = arith.constant 0 : i32
    return %c0_i32, %c0_i32_0 : i32, i32
  }
  func.func @transform_7(%arg0: i32) -> (i32, i32) {
    %c0_i32 = arith.constant 0 : i32
    %c0_i32_0 = arith.constant 0 : i32
    %c0_i32_1 = arith.constant 0 : i32
    return %c0_i32, %c0_i32_0 : i32, i32
  }
  func.func @transform_8(%arg0: i32) -> (i32, i32) {
    %c0_i32 = arith.constant 0 : i32
    %c0_i32_0 = arith.constant 0 : i32
    %c0_i32_1 = arith.constant 0 : i32
    return %c0_i32, %c0_i32_0 : i32, i32
  }
  func.func @transform_9(%arg0: i32) -> (i32, i32) {
    %c0_i32 = arith.constant 0 : i32
    %c0_i32_0 = arith.constant 0 : i32
    %c0_i32_1 = arith.constant 0 : i32
    return %c0_i32, %c0_i32_0 : i32, i32
  }
  func.func @transform_10(%arg0: i32) -> (i32, i32) {
    %c0_i32 = arith.constant 0 : i32
    %c0_i32_0 = arith.constant 0 : i32
    %c0_i32_1 = arith.constant 0 : i32
    return %c0_i32, %c0_i32_0 : i32, i32
  }
  func.func @transform_11(%arg0: i32) -> (i32, i32, i32) {
    %c0_i32 = arith.constant 0 : i32
    %c0_i32_0 = arith.constant 0 : i32
    %c0_i32_1 = arith.constant 0 : i32
    return %arg0, %c0_i32, %c0_i32_0 : i32, i32, i32
  }
  func.func @transform_12(%arg0: i32) -> (i32, i32, i32) {
    %c0_i32 = arith.constant 0 : i32
    %c0_i32_0 = arith.constant 0 : i32
    %c0_i32_1 = arith.constant 0 : i32
    return %arg0, %c0_i32, %c0_i32_0 : i32, i32, i32
  }
}

</mosaic_0001>

<llo_original>
// kernel: tpu_custom_call.1
$region0: #{tpu_custom_call.1}
  #allocation0 [shape = 'u32[]', space=smem, size = 0x4, offset = 0x4, fixed_abs, tag = 'smem constant byte address 0x4 - core index']
  #allocation1 [shape = 'u32[144,128]{1,0:T(1,128)}', space=vmem, size = 0x12000, scoped, tag = 'internal scratch']
  %s0 = inlined_call_operand.hbm [shape: f32[2,8,32], index: 0, kind: input, shape index: {}]
  %s1 = inlined_call_operand.hbm [shape: f32[2,8,32], index: 1, kind: input, shape index: {}]
  %s2 = inlined_call_operand.hbm [shape: f32[2,8,32], index: 2, kind: input, shape index: {}]
  %s3 = inlined_call_operand.hbm [shape: bf16[32,32], index: 3, kind: input, shape index: {}]
  %s4 = inlined_call_operand.hbm [shape: bf16[32,32], index: 4, kind: input, shape index: {}]
  %s5 = inlined_call_operand.vmem [shape: bf16[32,32], index: 5, kind: input, shape index: {}]
  %s6 = inlined_call_operand.hbm [shape: bf16[32,32], index: 6, kind: input, shape index: {}]
  %s7 = inlined_call_operand.vmem [shape: f32[1,32], index: 7, kind: input, shape index: {}]
  %s8 = inlined_call_operand.vmem [shape: f32[1,32], index: 8, kind: input, shape index: {}]
  %s9 = inlined_call_operand.vmem [shape: f32[1,32], index: 9, kind: input, shape index: {}]
  %s10 = inlined_call_operand.vmem [shape: f32[1,32], index: 10, kind: input, shape index: {}]
  %s11 = inlined_call_operand.hbm [shape: f32[2,8,32], index: 11, kind: output, shape index: {0}]
  %s12 = inlined_call_operand.hbm [shape: f32[2,8,8], index: 12, kind: output, shape index: {1}]
  %13 = xla_tuple %s11, %s12
  %s14 = sld [smem:[#allocation0]]
  $region109: #{tpu_custom_call.1} parent=0
    _
  %s16 = ssub.s32 1, %s14
  %s17 = scalar_select 0, %s16, %s14
  $region1: #{tpu_custom_call.1} parent=0
    #allocation2 [shape = 'u8[8192]{0}', space=vmem, size = 0x2000, scoped, tag = 'input window, operand 0']
    #allocation3 [shape = 's32[2]{0}', space=sflag, size = 0x8, scoped, tag = 'scoped memory for tpu_custom_call.1']
    #allocation4 [shape = 's32[2]{0}', space=sflag, size = 0x8, scoped, tag = 'scoped memory for tpu_custom_call.1']
    #allocation5 [shape = 'u8[8192]{0}', space=vmem, size = 0x2000, scoped, tag = 'input window, operand 1']
    #allocation6 [shape = 's32[2]{0}', space=sflag, size = 0x8, scoped, tag = 'scoped memory for tpu_custom_call.1']
    #allocation7 [shape = 'u8[8192]{0}', space=vmem, size = 0x2000, scoped, tag = 'input window, operand 2']
    #allocation8 [shape = 'u8[8192]{0}', space=vmem, size = 0x2000, scoped, tag = 'input window, operand 3, single buffered']
    #allocation9 [shape = 's32[1]{0}', space=sflag, size = 0x4, scoped, tag = 'scoped memory for tpu_custom_call.1']
    #allocation10 [shape = 'u8[8192]{0}', space=vmem, size = 0x2000, scoped, tag = 'input window, operand 4, single buffered']
    #allocation11 [shape = 'u8[8192]{0}', space=vmem, size = 0x2000, scoped, tag = 'input window, operand 6, single buffered']
    #allocation12 [shape = 's32[1]{0}', space=sflag, size = 0x4, scoped, tag = 'scoped memory for tpu_custom_call.1']
    #allocation13 [shape = 'u8[8192]{0}', space=vmem, size = 0x2000, scoped, tag = 'output window, operand 0']
    #allocation14 [shape = 'u8[8192]{0}', space=vmem, size = 0x2000, scoped, tag = 'output window, operand 1']
    #allocation15 [shape = 's32[2]{0}', space=sflag, size = 0x8, scoped, tag = 'scoped memory for tpu_custom_call.1']
    %18 = vsyncpa [#allocation3], 0
    %s19 = scalar_lea.sflag [#allocation3], 1
    %20 = vsyncpa %s19, 0
    %21 = vsyncpa [#allocation6], 0
    %s22 = scalar_lea.sflag [#allocation6], 1
    %23 = vsyncpa %s22, 0
    %24 = vsyncpa [#allocation9], 0
    %25 = vsyncpa [#allocation12], 0
    %26 = vsyncpa [#allocation4], 0
    %s27 = scalar_lea.sflag [#allocation4], 1
    %28 = vsyncpa %s27, 0
    %29 = vsyncpa [#allocation15], 0
    %s30 = scalar_lea.sflag [#allocation15], 1
    %31 = vsyncpa %s30, 0
    loop: start=0, step=1, limit=4
    $region2: #{tpu_custom_call.1} parent=1 // loop_pre_header
      _
    $region3: #{tpu_custom_call.1} parent=1 // loop_header
      %s33 = sphi 0, %s37
      %p34 = scmp.ge.s32.totalorder %s33, 4
      %s43 = sphi 0, %s45
      %s46 = sphi 0, %s43
      %s47 = sphi 0, %s46
      %s63 = sphi 0, %s47
      %s69 = sphi 0, %s71
      %s72 = sphi 0, %s69
      %s73 = sphi 0, %s72
      %s89 = sphi 0, %s73
      %s95 = sphi 0, %s97
      %s98 = sphi 0, %s95
      %s99 = sphi 0, %s98
      %s115 = sphi 0, %s99
      %s119 = sphi 0, %s119
      %s121 = sphi 0, %s119
      %s122 = sphi 0, %s121
      %s136 = sphi 0, %s122
      %s140 = sphi 0, %s140
      %s142 = sphi 0, %s140
      %s143 = sphi 0, %s142
      %s157 = sphi 0, %s143
      %s161 = sphi 0, %s161
      %s163 = sphi 0, %s161
      %s164 = sphi 0, %s163
      %s178 = sphi 0, %s164
      %s182 = sphi 0, %s182
      %s184 = sphi 0, %s182
      %s185 = sphi 0, %s184
      %s199 = sphi 0, %s185
      %s203 = sphi 0, %s203
      %s205 = sphi 0, %s203
      %s206 = sphi 0, %s205
      %s220 = sphi 0, %s206
      %s224 = sphi 0, %s224
      %s226 = sphi 0, %s224
      %s227 = sphi 0, %s226
      %s241 = sphi 0, %s227
      %s245 = sphi 0, %s245
      %s247 = sphi 0, %s245
      %s248 = sphi 0, %s247
      %s262 = sphi 0, %s248
      %s266 = sphi 0, %s266
      %s268 = sphi 0, %s266
      %s269 = sphi 0, %s268
      %s283 = sphi 0, %s269
      %s289 = sphi 0, %s291
      %s292 = sphi 0, %s289
      %s293 = sphi 0, %s292
      %s309 = sphi 0, %s293
      %s315 = sphi 0, %s317
      %s318 = sphi 0, %s315
      %s319 = sphi 0, %s318
      %s335 = sphi 0, %s319
    $region4: #{tpu_custom_call.1} parent=1 // loop_header_branch
      %36 = sbr.rel (%p34) target = $region8
    $region5: #{tpu_custom_call.1} parent=1 // loop_body
      %s38 = ssub.s32 %s33, 1
      %s39 = ssub.s32 %s33, 2
      %s40 = sadd.s32 %s33, 1
      %s41 = ssub.s32 %s33, %s40
      %p42 = scmp.eq.s32.totalorder %s41, 0
      %s44 = sadd.s32 %s43, 1
      %s45 = scalar_select %p42, %s43, %s44
      %p48 = pneg %p42
      %p49 = scmp.eq.s32.totalorder %s33, 1
      %p50 = por %p48, %p49
      %p51 = scmp.ne.s32.totalorder %s43, %s46
      %p52 = scmp.eq.s32.totalorder %s33, 0
      %p53 = por %p51, %p52
      %p54 = scmp.ne.s32.totalorder %s43, %s46
      %p55 = scmp.eq.s32.totalorder %s38, 1
      %p56 = por %p54, %p55
      %p57 = scmp.ne.s32.totalorder %s46, %s47
      %p58 = scmp.eq.s32.totalorder %s38, 0
      %p59 = por %p57, %p58
      %p60 = scmp.ne.s32.totalorder %s46, %s47
      %p61 = scmp.eq.s32.totalorder %s39, 1
      %p62 = por %p60, %p61
      %p64 = scmp.ne.s32.totalorder %s47, %s63
      %p65 = scmp.eq.s32.totalorder %s39, 0
      %p66 = por %p64, %p65
      %s67 = ssub.s32 %s33, %s40
      %p68 = scmp.eq.s32.totalorder %s67, 0
      %s70 = sadd.s32 %s69, 1
      %s71 = scalar_select %p68, %s69, %s70
      %p74 = pneg %p68
      %p75 = scmp.eq.s32.totalorder %s33, 1
      %p76 = por %p74, %p75
      %p77 = scmp.ne.s32.totalorder %s69, %s72
      %p78 = scmp.eq.s32.totalorder %s33, 0
      %p79 = por %p77, %p78
      %p80 = scmp.ne.s32.totalorder %s69, %s72
      %p81 = scmp.eq.s32.totalorder %s38, 1
      %p82 = por %p80, %p81
      %p83 = scmp.ne.s32.totalorder %s72, %s73
      %p84 = scmp.eq.s32.totalorder %s38, 0
      %p85 = por %p83, %p84
      %p86 = scmp.ne.s32.totalorder %s72, %s73
      %p87 = scmp.eq.s32.totalorder %s39, 1
      %p88 = por %p86, %p87
      %p90 = scmp.ne.s32.totalorder %s73, %s89
      %p91 = scmp.eq.s32.totalorder %s39, 0
      %p92 = por %p90, %p91
      %s93 = ssub.s32 %s33, %s40
      %p94 = scmp.eq.s32.totalorder %s93, 0
      %s96 = sadd.s32 %s95, 1
      %s97 = scalar_select %p94, %s95, %s96
      %p100 = pneg %p94
      %p101 = scmp.eq.s32.totalorder %s33, 1
      %p102 = por %p100, %p101
      %p103 = scmp.ne.s32.totalorder %s95, %s98
      %p104 = scmp.eq.s32.totalorder %s33, 0
      %p105 = por %p103, %p104
      %p106 = scmp.ne.s32.totalorder %s95, %s98
      %p107 = scmp.eq.s32.totalorder %s38, 1
      %p108 = por %p106, %p107
      %p109 = scmp.ne.s32.totalorder %s98, %s99
      %p110 = scmp.eq.s32.totalorder %s38, 0
      %p111 = por %p109, %p110
      %p112 = scmp.ne.s32.totalorder %s98, %s99
      %p113 = scmp.eq.s32.totalorder %s39, 1
      %p114 = por %p112, %p113
      %p116 = scmp.ne.s32.totalorder %s99, %s115
      %p117 = scmp.eq.s32.totalorder %s39, 0
      %p118 = por %p116, %p117
      %s120 = sadd.s32 %s119, 1
      %p123 = scmp.eq.s32.totalorder %s33, 1
      %p124 = scmp.ne.s32.totalorder %s119, %s121
      %p125 = scmp.eq.s32.totalorder %s33, 0
      %p126 = por %p124, %p125
      %p127 = scmp.ne.s32.totalorder %s119, %s121
      %p128 = scmp.eq.s32.totalorder %s38, 1
      %p129 = por %p127, %p128
      %p130 = scmp.ne.s32.totalorder %s121, %s122
      %p131 = scmp.eq.s32.totalorder %s38, 0
      %p132 = por %p130, %p131
      %p133 = scmp.ne.s32.totalorder %s121, %s122
      %p134 = scmp.eq.s32.totalorder %s39, 1
      %p135 = por %p133, %p134
      %p137 = scmp.ne.s32.totalorder %s122, %s136
      %p138 = scmp.eq.s32.totalorder %s39, 0
      %p139 = por %p137, %p138
      %s141 = sadd.s32 %s140, 1
      %p144 = scmp.eq.s32.totalorder %s33, 1
      %p145 = scmp.ne.s32.totalorder %s140, %s142
      %p146 = scmp.eq.s32.totalorder %s33, 0
      %p147 = por %p145, %p146
      %p148 = scmp.ne.s32.totalorder %s140, %s142
      %p149 = scmp.eq.s32.totalorder %s38, 1
      %p150 = por %p148, %p149
      %p151 = scmp.ne.s32.totalorder %s142, %s143
      %p152 = scmp.eq.s32.totalorder %s38, 0
      %p153 = por %p151, %p152
      %p154 = scmp.ne.s32.totalorder %s142, %s143
      %p155 = scmp.eq.s32.totalorder %s39, 1
      %p156 = por %p154, %p155
      %p158 = scmp.ne.s32.totalorder %s143, %s157
      %p159 = scmp.eq.s32.totalorder %s39, 0
      %p160 = por %p158, %p159
      %s162 = sadd.s32 %s161, 1
      %p165 = scmp.eq.s32.totalorder %s33, 1
      %p166 = scmp.ne.s32.totalorder %s161, %s163
      %p167 = scmp.eq.s32.totalorder %s33, 0
      %p168 = por %p166, %p167
      %p169 = scmp.ne.s32.totalorder %s161, %s163
      %p170 = scmp.eq.s32.totalorder %s38, 1
      %p171 = por %p169, %p170
      %p172 = scmp.ne.s32.totalorder %s163, %s164
      %p173 = scmp.eq.s32.totalorder %s38, 0
      %p174 = por %p172, %p173
      %p175 = scmp.ne.s32.totalorder %s163, %s164
      %p176 = scmp.eq.s32.totalorder %s39, 1
      %p177 = por %p175, %p176
      %p179 = scmp.ne.s32.totalorder %s164, %s178
      %p180 = scmp.eq.s32.totalorder %s39, 0
      %p181 = por %p179, %p180
      %s183 = sadd.s32 %s182, 1
      %p186 = scmp.eq.s32.totalorder %s33, 1
      %p187 = scmp.ne.s32.totalorder %s182, %s184
      %p188 = scmp.eq.s32.totalorder %s33, 0
      %p189 = por %p187, %p188
      %p190 = scmp.ne.s32.totalorder %s182, %s184
      %p191 = scmp.eq.s32.totalorder %s38, 1
      %p192 = por %p190, %p191
      %p193 = scmp.ne.s32.totalorder %s184, %s185
      %p194 = scmp.eq.s32.totalorder %s38, 0
      %p195 = por %p193, %p194
      %p196 = scmp.ne.s32.totalorder %s184, %s185
      %p197 = scmp.eq.s32.totalorder %s39, 1
      %p198 = por %p196, %p197
      %p200 = scmp.ne.s32.totalorder %s185, %s199
      %p201 = scmp.eq.s32.totalorder %s39, 0
      %p202 = por %p200, %p201
      %s204 = sadd.s32 %s203, 1
      %p207 = scmp.eq.s32.totalorder %s33, 1
      %p208 = scmp.ne.s32.totalorder %s203, %s205
      %p209 = scmp.eq.s32.totalorder %s33, 0
      %p210 = por %p208, %p209
      %p211 = scmp.ne.s32.totalorder %s203, %s205
      %p212 = scmp.eq.s32.totalorder %s38, 1
      %p213 = por %p211, %p212
      %p214 = scmp.ne.s32.totalorder %s205, %s206
      %p215 = scmp.eq.s32.totalorder %s38, 0
      %p216 = por %p214, %p215
      %p217 = scmp.ne.s32.totalorder %s205, %s206
      %p218 = scmp.eq.s32.totalorder %s39, 1
      %p219 = por %p217, %p218
      %p221 = scmp.ne.s32.totalorder %s206, %s220
      %p222 = scmp.eq.s32.totalorder %s39, 0
      %p223 = por %p221, %p222
      %s225 = sadd.s32 %s224, 1
      %p228 = scmp.eq.s32.totalorder %s33, 1
      %p229 = scmp.ne.s32.totalorder %s224, %s226
      %p230 = scmp.eq.s32.totalorder %s33, 0
      %p231 = por %p229, %p230
      %p232 = scmp.ne.s32.totalorder %s224, %s226
      %p233 = scmp.eq.s32.totalorder %s38, 1
      %p234 = por %p232, %p233
      %p235 = scmp.ne.s32.totalorder %s226, %s227
      %p236 = scmp.eq.s32.totalorder %s38, 0
      %p237 = por %p235, %p236
      %p238 = scmp.ne.s32.totalorder %s226, %s227
      %p239 = scmp.eq.s32.totalorder %s39, 1
      %p240 = por %p238, %p239
      %p242 = scmp.ne.s32.totalorder %s227, %s241
      %p243 = scmp.eq.s32.totalorder %s39, 0
      %p244 = por %p242, %p243
      %s246 = sadd.s32 %s245, 1
      %p249 = scmp.eq.s32.totalorder %s33, 1
      %p250 = scmp.ne.s32.totalorder %s245, %s247
      %p251 = scmp.eq.s32.totalorder %s33, 0
      %p252 = por %p250, %p251
      %p253 = scmp.ne.s32.totalorder %s245, %s247
      %p254 = scmp.eq.s32.totalorder %s38, 1
      %p255 = por %p253, %p254
      %p256 = scmp.ne.s32.totalorder %s247, %s248
      %p257 = scmp.eq.s32.totalorder %s38, 0
      %p258 = por %p256, %p257
      %p259 = scmp.ne.s32.totalorder %s247, %s248
      %p260 = scmp.eq.s32.totalorder %s39, 1
      %p261 = por %p259, %p260
      %p263 = scmp.ne.s32.totalorder %s248, %s262
      %p264 = scmp.eq.s32.totalorder %s39, 0
      %p265 = por %p263, %p264
      %s267 = sadd.s32 %s266, 1
      %p270 = scmp.eq.s32.totalorder %s33, 1
      %p271 = scmp.ne.s32.totalorder %s266, %s268
      %p272 = scmp.eq.s32.totalorder %s33, 0
      %p273 = por %p271, %p272
      %p274 = scmp.ne.s32.totalorder %s266, %s268
      %p275 = scmp.eq.s32.totalorder %s38, 1
      %p276 = por %p274, %p275
      %p277 = scmp.ne.s32.totalorder %s268, %s269
      %p278 = scmp.eq.s32.totalorder %s38, 0
      %p279 = por %p277, %p278
      %p280 = scmp.ne.s32.totalorder %s268, %s269
      %p281 = scmp.eq.s32.totalorder %s39, 1
      %p282 = por %p280, %p281
      %p284 = scmp.ne.s32.totalorder %s269, %s283
      %p285 = scmp.eq.s32.totalorder %s39, 0
      %p286 = por %p284, %p285
      %s287 = ssub.s32 %s33, %s40
      %p288 = scmp.eq.s32.totalorder %s287, 0
      %s290 = sadd.s32 %s289, 1
      %s291 = scalar_select %p288, %s289, %s290
      %p294 = pneg %p288
      %p295 = scmp.eq.s32.totalorder %s33, 1
      %p296 = por %p294, %p295
      %p297 = scmp.ne.s32.totalorder %s289, %s292
      %p298 = scmp.eq.s32.totalorder %s33, 0
      %p299 = por %p297, %p298
      %p300 = scmp.ne.s32.totalorder %s289, %s292
      %p301 = scmp.eq.s32.totalorder %s38, 1
      %p302 = por %p300, %p301
      %p303 = scmp.ne.s32.totalorder %s292, %s293
      %p304 = scmp.eq.s32.totalorder %s38, 0
      %p305 = por %p303, %p304
      %p306 = scmp.ne.s32.totalorder %s292, %s293
      %p307 = scmp.eq.s32.totalorder %s39, 1
      %p308 = por %p306, %p307
      %p310 = scmp.ne.s32.totalorder %s293, %s309
      %p311 = scmp.eq.s32.totalorder %s39, 0
      %p312 = por %p310, %p311
      %s313 = ssub.s32 %s33, %s40
      %p314 = scmp.eq.s32.totalorder %s313, 0
      %s316 = sadd.s32 %s315, 1
      %s317 = scalar_select %p314, %s315, %s316
      %p320 = pneg %p314
      %p321 = scmp.eq.s32.totalorder %s33, 1
      %p322 = por %p320, %p321
      %p323 = scmp.ne.s32.totalorder %s315, %s318
      %p324 = scmp.eq.s32.totalorder %s33, 0
      %p325 = por %p323, %p324
      %p326 = scmp.ne.s32.totalorder %s315, %s318
      %p327 = scmp.eq.s32.totalorder %s38, 1
      %p328 = por %p326, %p327
      %p329 = scmp.ne.s32.totalorder %s318, %s319
      %p330 = scmp.eq.s32.totalorder %s38, 0
      %p331 = por %p329, %p330
      %p332 = scmp.ne.s32.totalorder %s318, %s319
      %p333 = scmp.eq.s32.totalorder %s39, 1
      %p334 = por %p332, %p333
      %p336 = scmp.ne.s32.totalorder %s319, %s335
      %p337 = scmp.eq.s32.totalorder %s39, 0
      %p338 = por %p336, %p337
      %p339 = scmp.le.s32.totalorder 1, %s33
      %p340 = scmp.lt.s32.totalorder %s33, 3
      %p341 = pnand %p339, %p340
      %p342 = pneg %p341
      // Predicated region
      $region9: #{tpu_custom_call.1} parent=5 // pred_check
        _
      $region10: #{tpu_custom_call.1} parent=5 // pred_check_branch
        %344 = sbr.rel (%p341) target = $region12
      $region11: #{tpu_custom_call.1} parent=5 // pred_region
        %s345 = ssub.s32 %s33, 1
        // Predicated region
        $region13: #{tpu_custom_call.1} parent=11 // pred_check
          %p346 = pneg %p132
        $region14: #{tpu_custom_call.1} parent=11 // pred_check_branch
          %348 = sbr.rel (%p346) target = $region16
        $region15: #{tpu_custom_call.1} parent=11 // pred_region
          %s350 = ssub.s32 256, 256
          %351 = vsyncadd [#allocation9], %s350
          %s352 = sshll.u32 [#allocation8], 4
          %s353 = int_to_ptr.vmem [resolvable:$true] %s352
          %358 = dma.hbm_to_vmem [thread:$0]  %s3, 256, %s353, [#allocation9], 64, 64, 4
        $region16: #{tpu_custom_call.1} parent=11 // pred_fallthru
          _
        // Predicated region
        $region17: #{tpu_custom_call.1} parent=11 // pred_check
          %p359 = pneg %p153
        $region18: #{tpu_custom_call.1} parent=11 // pred_check_branch
          %361 = sbr.rel (%p359) target = $region20
        $region19: #{tpu_custom_call.1} parent=11 // pred_region
          %s363 = ssub.s32 256, 256
          %364 = vsyncadd [#allocation9], %s363
          %s365 = sshll.u32 [#allocation10], 4
          %s366 = int_to_ptr.vmem [resolvable:$true] %s365
          %371 = dma.hbm_to_vmem [thread:$0]  %s4, 256, %s366, [#allocation9], 64, 64, 4
        $region20: #{tpu_custom_call.1} parent=11 // pred_fallthru
          _
        // Predicated region
        $region21: #{tpu_custom_call.1} parent=11 // pred_check
          %p372 = pneg %p174
        $region22: #{tpu_custom_call.1} parent=11 // pred_check_branch
          %374 = sbr.rel (%p372) target = $region24
        $region23: #{tpu_custom_call.1} parent=11 // pred_region
          _
        $region24: #{tpu_custom_call.1} parent=11 // pred_fallthru
          _
        // Predicated region
        $region25: #{tpu_custom_call.1} parent=11 // pred_check
          %p375 = pneg %p195
        $region26: #{tpu_custom_call.1} parent=11 // pred_check_branch
          %377 = sbr.rel (%p375) target = $region28
        $region27: #{tpu_custom_call.1} parent=11 // pred_region
          %s379 = ssub.s32 256, 256
          %380 = vsyncadd [#allocation12], %s379
          %s381 = sshll.u32 [#allocation11], 4
          %s382 = int_to_ptr.vmem [resolvable:$true] %s381
          %387 = dma.hbm_to_vmem [thread:$0]  %s6, 256, %s382, [#allocation12], 64, 64, 4
        $region28: #{tpu_custom_call.1} parent=11 // pred_fallthru
          _
        // Predicated region
        $region29: #{tpu_custom_call.1} parent=11 // pred_check
          %p388 = pneg %p216
        $region30: #{tpu_custom_call.1} parent=11 // pred_check_branch
          %390 = sbr.rel (%p388) target = $region32
        $region31: #{tpu_custom_call.1} parent=11 // pred_region
          _
        $region32: #{tpu_custom_call.1} parent=11 // pred_fallthru
          _
        // Predicated region
        $region33: #{tpu_custom_call.1} parent=11 // pred_check
          %p391 = pneg %p237
        $region34: #{tpu_custom_call.1} parent=11 // pred_check_branch
          %393 = sbr.rel (%p391) target = $region36
        $region35: #{tpu_custom_call.1} parent=11 // pred_region
          _
        $region36: #{tpu_custom_call.1} parent=11 // pred_fallthru
          _
        // Predicated region
        $region37: #{tpu_custom_call.1} parent=11 // pred_check
          %p394 = pneg %p258
        $region38: #{tpu_custom_call.1} parent=11 // pred_check_branch
          %396 = sbr.rel (%p394) target = $region40
        $region39: #{tpu_custom_call.1} parent=11 // pred_region
          _
        $region40: #{tpu_custom_call.1} parent=11 // pred_fallthru
          _
        // Predicated region
        $region41: #{tpu_custom_call.1} parent=11 // pred_check
          %p397 = pneg %p279
        $region42: #{tpu_custom_call.1} parent=11 // pred_check_branch
          %399 = sbr.rel (%p397) target = $region44
        $region43: #{tpu_custom_call.1} parent=11 // pred_region
          _
        $region44: #{tpu_custom_call.1} parent=11 // pred_fallthru
          _
      $region12: #{tpu_custom_call.1} parent=5 // pred_fallthru
        _
      %p400 = scmp.lt.s32.totalorder %s33, 2
      // Predicated region
      $region45: #{tpu_custom_call.1} parent=5 // pred_check
        %p401 = pneg %p400
      $region46: #{tpu_custom_call.1} parent=5 // pred_check_branch
        %403 = sbr.rel (%p401) target = $region48
      $region47: #{tpu_custom_call.1} parent=5 // pred_region
        // Predicated region
        $region49: #{tpu_custom_call.1} parent=47 // pred_check
          %p404 = pneg %p53
        $region50: #{tpu_custom_call.1} parent=47 // pred_check_branch
          %406 = sbr.rel (%p404) target = $region52
        $region51: #{tpu_custom_call.1} parent=47 // pred_region
          %s407 = sand.u32 %s43, 1
          %s408 = scalar_lea.sflag [#allocation3], %s407
          %s409 = sand.u32 %s43, 1
          %s410 = smul.addr %s409, 8
          %s411 = scalar_lea.vmem [#allocation2], %s410
          %s413 = ssub.s32 128, 128
          %414 = vsyncadd %s408, %s413
          %s415 = smul.addr %s33, 128
          %s416 = scalar_lea.hbm %s0, %s415
          %s418 = sshll.u32 %s411, 4
          %s419 = int_to_ptr.vmem [resolvable:$true] %s418
          %421 = dma.hbm_to_vmem [thread:$0]  %s416, 128, %s419, %s408
        $region52: #{tpu_custom_call.1} parent=47 // pred_fallthru
          _
        // Predicated region
        $region53: #{tpu_custom_call.1} parent=47 // pred_check
          %p422 = pneg %p79
        $region54: #{tpu_custom_call.1} parent=47 // pred_check_branch
          %424 = sbr.rel (%p422) target = $region56
        $region55: #{tpu_custom_call.1} parent=47 // pred_region
          %s425 = sand.u32 %s33, 1
          %s426 = scalar_lea.sflag [#allocation6], %s425
          %s427 = sand.u32 %s69, 1
          %s428 = smul.addr %s427, 8
          %s429 = scalar_lea.vmem [#allocation5], %s428
          %s431 = ssub.s32 128, 128
          %432 = vsyncadd %s426, %s431
          %s433 = smul.addr %s33, 128
          %s434 = scalar_lea.hbm %s1, %s433
          %s436 = sshll.u32 %s429, 4
          %s437 = int_to_ptr.vmem [resolvable:$true] %s436
          %439 = dma.hbm_to_vmem [thread:$0]  %s434, 128, %s437, %s426
        $region56: #{tpu_custom_call.1} parent=47 // pred_fallthru
          _
        // Predicated region
        $region57: #{tpu_custom_call.1} parent=47 // pred_check
          %p440 = pneg %p105
        $region58: #{tpu_custom_call.1} parent=47 // pred_check_branch
          %442 = sbr.rel (%p440) target = $region60
        $region59: #{tpu_custom_call.1} parent=47 // pred_region
          %s443 = sand.u32 %s33, 1
          %s444 = scalar_lea.sflag [#allocation6], %s443
          %s445 = sand.u32 %s95, 1
          %s446 = smul.addr %s445, 8
          %s447 = scalar_lea.vmem [#allocation7], %s446
          %s449 = ssub.s32 128, 128
          %450 = vsyncadd %s444, %s449
          %s451 = smul.addr %s33, 128
          %s452 = scalar_lea.hbm %s2, %s451
          %s454 = sshll.u32 %s447, 4
          %s455 = int_to_ptr.vmem [resolvable:$true] %s454
          %457 = dma.hbm_to_vmem [thread:$0]  %s452, 128, %s455, %s444
        $region60: #{tpu_custom_call.1} parent=47 // pred_fallthru
          _
      $region48: #{tpu_custom_call.1} parent=5 // pred_fallthru
        _
      %p458 = scmp.le.s32.totalorder 1, %s33
      %p459 = scmp.lt.s32.totalorder %s33, 3
      %p460 = pnand %p458, %p459
      %p461 = pneg %p460
      // Predicated region
      $region61: #{tpu_custom_call.1} parent=5 // pred_check
        _
      $region62: #{tpu_custom_call.1} parent=5 // pred_check_branch
        %463 = sbr.rel (%p460) target = $region64
      $region63: #{tpu_custom_call.1} parent=5 // pred_region
        %s464 = ssub.s32 %s33, 1
        %s465 = sand.u32 %s46, 1
        %s466 = scalar_lea.sflag [#allocation3], %s465
        %s467 = sand.u32 %s46, 1
        %s468 = smul.addr %s467, 8
        %s469 = scalar_lea.vmem [#allocation2], %s468
        // Predicated region
        $region65: #{tpu_custom_call.1} parent=63 // pred_check
          %p470 = pneg %p59
        $region66: #{tpu_custom_call.1} parent=63 // pred_check_branch
          %472 = sbr.rel (%p470) target = $region68
        $region67: #{tpu_custom_call.1} parent=63 // pred_region
          %473 = dma.done %s466, 128
        $region68: #{tpu_custom_call.1} parent=63 // pred_fallthru
          _
        %s474 = sand.u32 %s38, 1
        %s475 = scalar_lea.sflag [#allocation6], %s474
        %s476 = sand.u32 %s72, 1
        %s477 = smul.addr %s476, 8
        %s478 = scalar_lea.vmem [#allocation5], %s477
        // Predicated region
        $region69: #{tpu_custom_call.1} parent=63 // pred_check
          %p479 = pneg %p85
        $region70: #{tpu_custom_call.1} parent=63 // pred_check_branch
          %481 = sbr.rel (%p479) target = $region72
        $region71: #{tpu_custom_call.1} parent=63 // pred_region
          %482 = dma.done %s475, 128
        $region72: #{tpu_custom_call.1} parent=63 // pred_fallthru
          _
        %s483 = sand.u32 %s38, 1
        %s484 = scalar_lea.sflag [#allocation6], %s483
        %s485 = sand.u32 %s98, 1
        %s486 = smul.addr %s485, 8
        %s487 = scalar_lea.vmem [#allocation7], %s486
        // Predicated region
        $region73: #{tpu_custom_call.1} parent=63 // pred_check
          %p488 = pneg %p111
        $region74: #{tpu_custom_call.1} parent=63 // pred_check_branch
          %490 = sbr.rel (%p488) target = $region76
        $region75: #{tpu_custom_call.1} parent=63 // pred_region
          %491 = dma.done %s484, 128
        $region76: #{tpu_custom_call.1} parent=63 // pred_fallthru
          _
        // Predicated region
        $region77: #{tpu_custom_call.1} parent=63 // pred_check
          %p492 = pneg %p132
        $region78: #{tpu_custom_call.1} parent=63 // pred_check_branch
          %494 = sbr.rel (%p492) target = $region80
        $region79: #{tpu_custom_call.1} parent=63 // pred_region
          %495 = dma.done [#allocation9], 256
        $region80: #{tpu_custom_call.1} parent=63 // pred_fallthru
          _
        // Predicated region
        $region81: #{tpu_custom_call.1} parent=63 // pred_check
          %p496 = pneg %p153
        $region82: #{tpu_custom_call.1} parent=63 // pred_check_branch
          %498 = sbr.rel (%p496) target = $region84
        $region83: #{tpu_custom_call.1} parent=63 // pred_region
          %499 = dma.done [#allocation9], 256
        $region84: #{tpu_custom_call.1} parent=63 // pred_fallthru
          _
        // Predicated region
        $region85: #{tpu_custom_call.1} parent=63 // pred_check
          %p500 = pneg %p195
        $region86: #{tpu_custom_call.1} parent=63 // pred_check_branch
          %502 = sbr.rel (%p500) target = $region88
        $region87: #{tpu_custom_call.1} parent=63 // pred_region
          %503 = dma.done [#allocation12], 256
        $region88: #{tpu_custom_call.1} parent=63 // pred_fallthru
          _
        %s504 = sand.u32 %s46, 1
        %s505 = scalar_lea.sflag [#allocation3], %s504
        %s506 = sand.u32 %s46, 1
        %s507 = smul.addr %s506, 8
        %s508 = scalar_lea.vmem [#allocation2], %s507
        %p509 = pneg %p59
        %p510 = pneg %p56
        %s511 = sand.u32 %s38, 1
        %s512 = scalar_lea.sflag [#allocation6], %s511
        %s513 = sand.u32 %s72, 1
        %s514 = smul.addr %s513, 8
        %s515 = scalar_lea.vmem [#allocation5], %s514
        %p516 = pneg %p85
        %p517 = pneg %p82
        %s518 = sand.u32 %s38, 1
        %s519 = scalar_lea.sflag [#allocation6], %s518
        %s520 = sand.u32 %s98, 1
        %s521 = smul.addr %s520, 8
        %s522 = scalar_lea.vmem [#allocation7], %s521
        %p523 = pneg %p111
        %p524 = pneg %p108
        %p525 = pneg %p132
        %p526 = pneg %p129
        %p527 = pneg %p153
        %p528 = pneg %p150
        %p529 = pneg %p174
        %p530 = pneg %p171
        %p531 = pneg %p195
        %p532 = pneg %p192
        %p533 = pneg %p216
        %p534 = pneg %p213
        %p535 = pneg %p237
        %p536 = pneg %p234
        %p537 = pneg %p258
        %p538 = pneg %p255
        %p539 = pneg %p279
        %p540 = pneg %p276
        %p541 = pneg %p305
        %p542 = pneg %p302
        %s543 = sand.u32 %s292, 1
        %s544 = scalar_lea.sflag [#allocation4], %s543
        %s545 = sand.u32 %s292, 1
        %s546 = smul.addr %s545, 8
        %s547 = scalar_lea.vmem [#allocation13], %s546
        %p548 = pneg %p331
        %p549 = pneg %p328
        %s550 = sand.u32 %s318, 1
        %s551 = scalar_lea.sflag [#allocation15], %s550
        %s552 = sand.u32 %s318, 1
        %s553 = smul.addr %s552, 8
        %s554 = scalar_lea.vmem [#allocation14], %s553
        %v556 = vld [vmem:[%s469] sm:$0xff]
        %v557 = vpack.c.bf16 %v556, %v556
        %v558 = vld [vmem:[%s478] sm:$0xff]
        %v559 = vpack.c.bf16 %v558, %v558
        %v560 = vld [vmem:[%s487] sm:$0xff]
        %v561 = vpack.c.bf16 %v560, %v560
        %v562 = vld [vmem:[#allocation8] sm:$0xf]
        %v563 = vld [vmem:[#allocation8 + $0x4] sm:$0xf]
        %v564 = vld [vmem:[#allocation8 + $0x8] sm:$0xf]
        %v565 = vld [vmem:[#allocation8 + $0xc] sm:$0xf]
        %v566 = vld [vmem:[%s7] sm:$0x1]
        %v568 = vlaneseq
        %v569 = vshrl.u32 %v568, 7
        %v570 = vsub.s32 0, %v569
        %v571 = vrot.slane %v566, %v570
        %v577 = vunpack.c.l.b16 %v562
        %v578 = vunpack.c.l.b16 %v563
        %v579 = vunpack.c.l.b16 %v564
        %v580 = vunpack.c.l.b16 %v565
        %v581 = vpack.c.b16 %v578, %v577
        %v582 = vpack.c.b16 %v580, %v579
        %vm585 = vcmask 261120
        %v587 = vsel %vm585, %v557, 0
        %589 = vmatprep.subr.bf16.mxu0 0
        %590 = vmatpush1.bf16.msra.mxu0 %v581
        %591 = vmatprep.subr.bf16.mxu0 0
        %592 = vmatpush1.bf16.msra.mxu0 %v582
        %593 = vmatprep.subr.bf16.mxu0 0
        %594 = vmatpush1.bf16.msra.mxu0 0
        %595 = vmatprep.subr.bf16.mxu0 0
        %596 = vmatpush1.bf16.msra.mxu0 0
        %597 = vmatprep.subr.bf16.mxu0 0
        %598 = vmatpush1.bf16.msra.mxu0 0
        %599 = vmatprep.subr.bf16.mxu0 0
        %600 = vmatpush1.bf16.msra.mxu0 0
        %601 = vmatprep.subr.bf16.mxu0 0
        %602 = vmatpush1.bf16.msra.mxu0 0
        %603 = vmatprep.subr.bf16.mxu0 0
        %604 = vmatpush1.bf16.msra.mxu0 0
        %605 = vmatprep.subr.bf16.mxu0 0
        %606 = vmatpush1.bf16.msra.mxu0 0
        %607 = vmatprep.subr.bf16.mxu0 0
        %608 = vmatpush1.bf16.msra.mxu0 0
        %609 = vmatprep.subr.bf16.mxu0 0
        %610 = vmatpush1.bf16.msra.mxu0 0
        %611 = vmatprep.subr.bf16.mxu0 0
        %612 = vmatpush1.bf16.msra.mxu0 0
        %613 = vmatprep.subr.bf16.mxu0 0
        %614 = vmatpush1.bf16.msra.mxu0 0
        %615 = vmatprep.subr.bf16.mxu0 0
        %616 = vmatpush1.bf16.msra.mxu0 0
        %617 = vmatprep.subr.bf16.mxu0 0
        %618 = vmatpush1.bf16.msra.mxu0 0
        %619 = vmatprep.subr.bf16.mxu0 0
        %620 = vmatpush1.bf16.msra.mxu0 0
        %621 = vmatprep.mubr.bf16.mxu0 0
        %622 = vmatmul.mubr.bf16.gmra.mrb[0].mxu0 %v587
        %v623 = vpop.f32.mrb[0].mxu0
        %v624 = vadd.f32 %v571, %v623
        %v625 = vpop.f32.mrb[0].mxu0
        %v626 = vpop.f32.mrb[0].mxu0
        %v627 = vpop.f32.mrb[0].mxu0
        %628 = vdwg.mxu0
        %v629 = vld [vmem:[#allocation10] sm:$0xf]
        %v630 = vld [vmem:[#allocation10 + $0x4] sm:$0xf]
        %v631 = vld [vmem:[#allocation10 + $0x8] sm:$0xf]
        %v632 = vld [vmem:[#allocation10 + $0xc] sm:$0xf]
        %v633 = vld [vmem:[%s8] sm:$0x1]
        %v635 = vlaneseq
        %v636 = vshrl.u32 %v635, 7
        %v637 = vsub.s32 0, %v636
        %v638 = vrot.slane %v633, %v637
        %v644 = vunpack.c.l.b16 %v629
        %v645 = vunpack.c.l.b16 %v630
        %v646 = vunpack.c.l.b16 %v631
        %v647 = vunpack.c.l.b16 %v632
        %v648 = vpack.c.b16 %v645, %v644
        %v649 = vpack.c.b16 %v647, %v646
        %v653 = vsel %vm585, %v559, 0
        %655 = vmatprep.subr.bf16.mxu0 0
        %656 = vmatpush1.bf16.msra.mxu0 %v648
        %657 = vmatprep.subr.bf16.mxu0 0
        %658 = vmatpush1.bf16.msra.mxu0 %v649
        %659 = vmatprep.subr.bf16.mxu0 0
        %660 = vmatpush1.bf16.msra.mxu0 0
        %661 = vmatprep.subr.bf16.mxu0 0
        %662 = vmatpush1.bf16.msra.mxu0 0
        %663 = vmatprep.subr.bf16.mxu0 0
        %664 = vmatpush1.bf16.msra.mxu0 0
        %665 = vmatprep.subr.bf16.mxu0 0
        %666 = vmatpush1.bf16.msra.mxu0 0
        %667 = vmatprep.subr.bf16.mxu0 0
        %668 = vmatpush1.bf16.msra.mxu0 0
        %669 = vmatprep.subr.bf16.mxu0 0
        %670 = vmatpush1.bf16.msra.mxu0 0
        %671 = vmatprep.subr.bf16.mxu0 0
        %672 = vmatpush1.bf16.msra.mxu0 0
        %673 = vmatprep.subr.bf16.mxu0 0
        %674 = vmatpush1.bf16.msra.mxu0 0
        %675 = vmatprep.subr.bf16.mxu0 0
        %676 = vmatpush1.bf16.msra.mxu0 0
        %677 = vmatprep.subr.bf16.mxu0 0
        %678 = vmatpush1.bf16.msra.mxu0 0
        %679 = vmatprep.subr.bf16.mxu0 0
        %680 = vmatpush1.bf16.msra.mxu0 0
        %681 = vmatprep.subr.bf16.mxu0 0
        %682 = vmatpush1.bf16.msra.mxu0 0
        %683 = vmatprep.subr.bf16.mxu0 0
        %684 = vmatpush1.bf16.msra.mxu0 0
        %685 = vmatprep.subr.bf16.mxu0 0
        %686 = vmatpush1.bf16.msra.mxu0 0
        %687 = vmatprep.mubr.bf16.mxu0 0
        %688 = vmatmul.mubr.bf16.gmra.mrb[0].mxu0 %v653
        %v689 = vpop.f32.mrb[0].mxu0
        %v690 = vadd.f32 %v638, %v689
        %v691 = vpop.f32.mrb[0].mxu0
        %v692 = vpop.f32.mrb[0].mxu0
        %v693 = vpop.f32.mrb[0].mxu0
        %694 = vdwg.mxu0
        %v695 = vld [vmem:[%s5] sm:$0xf]
        %v696 = vld [vmem:[%s5 + $0x4] sm:$0xf]
        %v697 = vld [vmem:[%s5 + $0x8] sm:$0xf]
        %v698 = vld [vmem:[%s5 + $0xc] sm:$0xf]
        %v699 = vld [vmem:[%s9] sm:$0x1]
        %v701 = vlaneseq
        %v702 = vshrl.u32 %v701, 7
        %v703 = vsub.s32 0, %v702
        %v704 = vrot.slane %v699, %v703
        %v710 = vunpack.c.l.b16 %v695
        %v711 = vunpack.c.l.b16 %v696
        %v712 = vunpack.c.l.b16 %v697
        %v713 = vunpack.c.l.b16 %v698
        %v714 = vpack.c.b16 %v711, %v710
        %v715 = vpack.c.b16 %v713, %v712
        %v719 = vsel %vm585, %v561, 0
        %721 = vmatprep.subr.bf16.mxu0 0
        %722 = vmatpush1.bf16.msra.mxu0 %v714
        %723 = vmatprep.subr.bf16.mxu0 0
        %724 = vmatpush1.bf16.msra.mxu0 %v715
        %725 = vmatprep.subr.bf16.mxu0 0
        %726 = vmatpush1.bf16.msra.mxu0 0
        %727 = vmatprep.subr.bf16.mxu0 0
        %728 = vmatpush1.bf16.msra.mxu0 0
        %729 = vmatprep.subr.bf16.mxu0 0
        %730 = vmatpush1.bf16.msra.mxu0 0
        %731 = vmatprep.subr.bf16.mxu0 0
        %732 = vmatpush1.bf16.msra.mxu0 0
        %733 = vmatprep.subr.bf16.mxu0 0
        %734 = vmatpush1.bf16.msra.mxu0 0
        %735 = vmatprep.subr.bf16.mxu0 0
        %736 = vmatpush1.bf16.msra.mxu0 0
        %737 = vmatprep.subr.bf16.mxu0 0
        %738 = vmatpush1.bf16.msra.mxu0 0
        %739 = vmatprep.subr.bf16.mxu0 0
        %740 = vmatpush1.bf16.msra.mxu0 0
        %741 = vmatprep.subr.bf16.mxu0 0
        %742 = vmatpush1.bf16.msra.mxu0 0
        %743 = vmatprep.subr.bf16.mxu0 0
        %744 = vmatpush1.bf16.msra.mxu0 0
        %745 = vmatprep.subr.bf16.mxu0 0
        %746 = vmatpush1.bf16.msra.mxu0 0
        %747 = vmatprep.subr.bf16.mxu0 0
        %748 = vmatpush1.bf16.msra.mxu0 0
        %749 = vmatprep.subr.bf16.mxu0 0
        %750 = vmatpush1.bf16.msra.mxu0 0
        %751 = vmatprep.subr.bf16.mxu0 0
        %752 = vmatpush1.bf16.msra.mxu0 0
        %753 = vmatprep.mubr.bf16.mxu0 0
        %754 = vmatmul.mubr.bf16.gmra.mrb[0].mxu0 %v719
        %v755 = vpop.f32.mrb[0].mxu0
        %v756 = vadd.f32 %v704, %v755
        %v757 = vpop.f32.mrb[0].mxu0
        %v758 = vpop.f32.mrb[0].mxu0
        %v759 = vpop.f32.mrb[0].mxu0
        %760 = vdwg.mxu0
        %v761 = vpack.c.bf16 %v624, %v624
        %v762 = vpack.c.bf16 %v690, %v690
        %v763 = vpack.c.bf16 %v756, %v756
        %vm764 = vcmask 64512
        %v766 = vsel %vm764, %v761, 0
        %v769 = vsel %vm764, %v762, 0
        %771 = vmatprep.subr.bf16.mxu0 0
        %772 = vmatpush1.bf16.xpose.msra.mxu0 %v769
        %773 = vmatprep.subr.bf16.mxu0 0
        %774 = vmatpush1.bf16.xpose.msra.mxu0 0
        %775 = vmatprep.subr.bf16.mxu0 0
        %776 = vmatpush1.bf16.xpose.msra.mxu0 0
        %777 = vmatprep.subr.bf16.mxu0 0
        %778 = vmatpush1.bf16.xpose.msra.mxu0 0
        %779 = vmatprep.subr.bf16.mxu0 0
        %780 = vmatpush1.bf16.xpose.msra.mxu0 0
        %781 = vmatprep.subr.bf16.mxu0 0
        %782 = vmatpush1.bf16.xpose.msra.mxu0 0
        %783 = vmatprep.subr.bf16.mxu0 0
        %784 = vmatpush1.bf16.xpose.msra.mxu0 0
        %785 = vmatprep.subr.bf16.mxu0 0
        %786 = vmatpush1.bf16.xpose.msra.mxu0 0
        %787 = vmatprep.subr.bf16.mxu0 0
        %788 = vmatpush1.bf16.xpose.msra.mxu0 0
        %789 = vmatprep.subr.bf16.mxu0 0
        %790 = vmatpush1.bf16.xpose.msra.mxu0 0
        %791 = vmatprep.subr.bf16.mxu0 0
        %792 = vmatpush1.bf16.xpose.msra.mxu0 0
        %793 = vmatprep.subr.bf16.mxu0 0
        %794 = vmatpush1.bf16.xpose.msra.mxu0 0
        %795 = vmatprep.subr.bf16.mxu0 0
        %796 = vmatpush1.bf16.xpose.msra.mxu0 0
        %797 = vmatprep.subr.bf16.mxu0 0
        %798 = vmatpush1.bf16.xpose.msra.mxu0 0
        %799 = vmatprep.subr.bf16.mxu0 0
        %800 = vmatpush1.bf16.xpose.msra.mxu0 0
        %801 = vmatprep.subr.bf16.mxu0 0
        %802 = vmatpush1.bf16.xpose.msra.mxu0 0
        %803 = vmatprep.mubr.bf16.mxu0 0
        %804 = vmatmul.mubr.bf16.gmra.mrb[0].mxu0 %v766
        %v805 = vpop.f32.mrb[0].mxu0
        %v806 = vadd.f32 0.0, %v805
        %v807 = vpop.f32.mrb[0].mxu0
        %v808 = vpop.f32.mrb[0].mxu0
        %v809 = vpop.f32.mrb[0].mxu0
        %810 = vdwg.mxu0
        %v811 = vmul.f32 %v806, 0.35355338
        %v812 = vsel %vm764, %v811, -inf
        %813 = vmax.xlane.f32.xlu0 %v812
        %v814 = vpop.xlane.xlu0 %813
        %v815 = vsub.f32 %v811, %v814
        %v816 = vmul.f32 %v815, 1.442695
        %v817 = vpow.pop %v816
        %v818 = vsel %vm764, %v817, 0.0
        %819 = vadd.xlane.f32.xlu0 %v818
        %v820 = vpop.xlane.xlu0 %819
        %v821 = vrcp.pop %v820
        %v822 = vmul.f32 %v817, %v821
        %v823 = vpack.c.bf16 %v822, %v822
        %v825 = vsel %vm764, %v823, 0
        %vm827 = vcmask 1043456
        %v829 = vsel %vm827, %v763, 0
        %831 = vmatprep.subr.bf16.mxu0 0
        %832 = vmatpush1.bf16.msra.mxu0 %v829
        %833 = vmatprep.subr.bf16.mxu0 0
        %834 = vmatpush1.bf16.msra.mxu0 0
        %835 = vmatprep.subr.bf16.mxu0 0
        %836 = vmatpush1.bf16.msra.mxu0 0
        %837 = vmatprep.subr.bf16.mxu0 0
        %838 = vmatpush1.bf16.msra.mxu0 0
        %839 = vmatprep.subr.bf16.mxu0 0
        %840 = vmatpush1.bf16.msra.mxu0 0
        %841 = vmatprep.subr.bf16.mxu0 0
        %842 = vmatpush1.bf16.msra.mxu0 0
        %843 = vmatprep.subr.bf16.mxu0 0
        %844 = vmatpush1.bf16.msra.mxu0 0
        %845 = vmatprep.subr.bf16.mxu0 0
        %846 = vmatpush1.bf16.msra.mxu0 0
        %847 = vmatprep.subr.bf16.mxu0 0
        %848 = vmatpush1.bf16.msra.mxu0 0
        %849 = vmatprep.subr.bf16.mxu0 0
        %850 = vmatpush1.bf16.msra.mxu0 0
        %851 = vmatprep.subr.bf16.mxu0 0
        %852 = vmatpush1.bf16.msra.mxu0 0
        %853 = vmatprep.subr.bf16.mxu0 0
        %854 = vmatpush1.bf16.msra.mxu0 0
        %855 = vmatprep.subr.bf16.mxu0 0
        %856 = vmatpush1.bf16.msra.mxu0 0
        %857 = vmatprep.subr.bf16.mxu0 0
        %858 = vmatpush1.bf16.msra.mxu0 0
        %859 = vmatprep.subr.bf16.mxu0 0
        %860 = vmatpush1.bf16.msra.mxu0 0
        %861 = vmatprep.subr.bf16.mxu0 0
        %862 = vmatpush1.bf16.msra.mxu0 0
        %863 = vmatprep.mubr.bf16.mxu0 0
        %864 = vmatmul.mubr.bf16.gmra.mrb[0].mxu0 %v825
        %v865 = vpop.f32.mrb[0].mxu0
        %v866 = vadd.f32 0.0, %v865
        %v867 = vpop.f32.mrb[0].mxu0
        %v868 = vpop.f32.mrb[0].mxu0
        %v869 = vpop.f32.mrb[0].mxu0
        %870 = vdwg.mxu0
        %872 = vrot.lane.b32.xlu0 %v761, 120
        %v873 = vpop.permute.xlu0 %872
        %875 = vrot.lane.b32.xlu0 %v762, 120
        %v876 = vpop.permute.xlu0 %875
        %v878 = vsel %vm764, %v873, 0
        %v881 = vsel %vm764, %v876, 0
        %883 = vmatprep.subr.bf16.mxu0 0
        %884 = vmatpush1.bf16.xpose.msra.mxu0 %v881
        %885 = vmatprep.subr.bf16.mxu0 0
        %886 = vmatpush1.bf16.xpose.msra.mxu0 0
        %887 = vmatprep.subr.bf16.mxu0 0
        %888 = vmatpush1.bf16.xpose.msra.mxu0 0
        %889 = vmatprep.subr.bf16.mxu0 0
        %890 = vmatpush1.bf16.xpose.msra.mxu0 0
        %891 = vmatprep.subr.bf16.mxu0 0
        %892 = vmatpush1.bf16.xpose.msra.mxu0 0
        %893 = vmatprep.subr.bf16.mxu0 0
        %894 = vmatpush1.bf16.xpose.msra.mxu0 0
        %895 = vmatprep.subr.bf16.mxu0 0
        %896 = vmatpush1.bf16.xpose.msra.mxu0 0
        %897 = vmatprep.subr.bf16.mxu0 0
        %898 = vmatpush1.bf16.xpose.msra.mxu0 0
        %899 = vmatprep.subr.bf16.mxu0 0
        %900 = vmatpush1.bf16.xpose.msra.mxu0 0
        %901 = vmatprep.subr.bf16.mxu0 0
        %902 = vmatpush1.bf16.xpose.msra.mxu0 0
        %903 = vmatprep.subr.bf16.mxu0 0
        %904 = vmatpush1.bf16.xpose.msra.mxu0 0
        %905 = vmatprep.subr.bf16.mxu0 0
        %906 = vmatpush1.bf16.xpose.msra.mxu0 0
        %907 = vmatprep.subr.bf16.mxu0 0
        %908 = vmatpush1.bf16.xpose.msra.mxu0 0
        %909 = vmatprep.subr.bf16.mxu0 0
        %910 = vmatpush1.bf16.xpose.msra.mxu0 0
        %911 = vmatprep.subr.bf16.mxu0 0
        %912 = vmatpush1.bf16.xpose.msra.mxu0 0
        %913 = vmatprep.subr.bf16.mxu0 0
        %914 = vmatpush1.bf16.xpose.msra.mxu0 0
        %915 = vmatprep.mubr.bf16.mxu0 0
        %916 = vmatmul.mubr.bf16.gmra.mrb[0].mxu0 %v878
        %v917 = vpop.f32.mrb[0].mxu0
        %v918 = vadd.f32 0.0, %v917
        %v919 = vpop.f32.mrb[0].mxu0
        %v920 = vpop.f32.mrb[0].mxu0
        %v921 = vpop.f32.mrb[0].mxu0
        %922 = vdwg.mxu0
        %v923 = vmul.f32 %v918, 0.35355338
        %v924 = vsel %vm764, %v923, -inf
        %925 = vmax.xlane.f32.xlu0 %v924
        %v926 = vpop.xlane.xlu0 %925
        %v927 = vsub.f32 %v923, %v926
        %v928 = vmul.f32 %v927, 1.442695
        %v929 = vpow.pop %v928
        %v930 = vsel %vm764, %v929, 0.0
        %931 = vadd.xlane.f32.xlu0 %v930
        %v932 = vpop.xlane.xlu0 %931
        %v933 = vrcp.pop %v932
        %v934 = vmul.f32 %v929, %v933
        %v935 = vpack.c.bf16 %v934, %v934
        %937 = vrot.lane.b32.xlu0 %v763, 120
        %v938 = vpop.permute.xlu0 %937
        %v940 = vsel %vm764, %v935, 0
        %v943 = vsel %vm827, %v938, 0
        %945 = vmatprep.subr.bf16.mxu0 0
        %946 = vmatpush1.bf16.msra.mxu0 %v943
        %947 = vmatprep.subr.bf16.mxu0 0
        %948 = vmatpush1.bf16.msra.mxu0 0
        %949 = vmatprep.subr.bf16.mxu0 0
        %950 = vmatpush1.bf16.msra.mxu0 0
        %951 = vmatprep.subr.bf16.mxu0 0
        %952 = vmatpush1.bf16.msra.mxu0 0
        %953 = vmatprep.subr.bf16.mxu0 0
        %954 = vmatpush1.bf16.msra.mxu0 0
        %955 = vmatprep.subr.bf16.mxu0 0
        %956 = vmatpush1.bf16.msra.mxu0 0
        %957 = vmatprep.subr.bf16.mxu0 0
        %958 = vmatpush1.bf16.msra.mxu0 0
        %959 = vmatprep.subr.bf16.mxu0 0
        %960 = vmatpush1.bf16.msra.mxu0 0
        %961 = vmatprep.subr.bf16.mxu0 0
        %962 = vmatpush1.bf16.msra.mxu0 0
        %963 = vmatprep.subr.bf16.mxu0 0
        %964 = vmatpush1.bf16.msra.mxu0 0
        %965 = vmatprep.subr.bf16.mxu0 0
        %966 = vmatpush1.bf16.msra.mxu0 0
        %967 = vmatprep.subr.bf16.mxu0 0
        %968 = vmatpush1.bf16.msra.mxu0 0
        %969 = vmatprep.subr.bf16.mxu0 0
        %970 = vmatpush1.bf16.msra.mxu0 0
        %971 = vmatprep.subr.bf16.mxu0 0
        %972 = vmatpush1.bf16.msra.mxu0 0
        %973 = vmatprep.subr.bf16.mxu0 0
        %974 = vmatpush1.bf16.msra.mxu0 0
        %975 = vmatprep.subr.bf16.mxu0 0
        %976 = vmatpush1.bf16.msra.mxu0 0
        %977 = vmatprep.mubr.bf16.mxu0 0
        %978 = vmatmul.mubr.bf16.gmra.mrb[0].mxu0 %v940
        %v979 = vpop.f32.mrb[0].mxu0
        %v980 = vadd.f32 0.0, %v979
        %v981 = vpop.f32.mrb[0].mxu0
        %v982 = vpop.f32.mrb[0].mxu0
        %v983 = vpop.f32.mrb[0].mxu0
        %984 = vdwg.mxu0
        %v985 = vadd.f32 %v822, %v934
        %986 = vrot.lane.b32.xlu0 %v761, 112
        %v987 = vpop.permute.xlu0 %986
        %988 = vrot.lane.b32.xlu0 %v762, 112
        %v989 = vpop.permute.xlu0 %988
        %v991 = vsel %vm764, %v987, 0
        %v994 = vsel %vm764, %v989, 0
        %996 = vmatprep.subr.bf16.mxu0 0
        %997 = vmatpush1.bf16.xpose.msra.mxu0 %v994
        %998 = vmatprep.subr.bf16.mxu0 0
        %999 = vmatpush1.bf16.xpose.msra.mxu0 0
        %1000 = vmatprep.subr.bf16.mxu0 0
        %1001 = vmatpush1.bf16.xpose.msra.mxu0 0
        %1002 = vmatprep.subr.bf16.mxu0 0
        %1003 = vmatpush1.bf16.xpose.msra.mxu0 0
        %1004 = vmatprep.subr.bf16.mxu0 0
        %1005 = vmatpush1.bf16.xpose.msra.mxu0 0
        %1006 = vmatprep.subr.bf16.mxu0 0
        %1007 = vmatpush1.bf16.xpose.msra.mxu0 0
        %1008 = vmatprep.subr.bf16.mxu0 0
        %1009 = vmatpush1.bf16.xpose.msra.mxu0 0
        %1010 = vmatprep.subr.bf16.mxu0 0
        %1011 = vmatpush1.bf16.xpose.msra.mxu0 0
        %1012 = vmatprep.subr.bf16.mxu0 0
        %1013 = vmatpush1.bf16.xpose.msra.mxu0 0
        %1014 = vmatprep.subr.bf16.mxu0 0
        %1015 = vmatpush1.bf16.xpose.msra.mxu0 0
        %1016 = vmatprep.subr.bf16.mxu0 0
        %1017 = vmatpush1.bf16.xpose.msra.mxu0 0
        %1018 = vmatprep.subr.bf16.mxu0 0
        %1019 = vmatpush1.bf16.xpose.msra.mxu0 0
        %1020 = vmatprep.subr.bf16.mxu0 0
        %1021 = vmatpush1.bf16.xpose.msra.mxu0 0
        %1022 = vmatprep.subr.bf16.mxu0 0
        %1023 = vmatpush1.bf16.xpose.msra.mxu0 0
        %1024 = vmatprep.subr.bf16.mxu0 0
        %1025 = vmatpush1.bf16.xpose.msra.mxu0 0
        %1026 = vmatprep.subr.bf16.mxu0 0
        %1027 = vmatpush1.bf16.xpose.msra.mxu0 0
        %1028 = vmatprep.mubr.bf16.mxu0 0
        %1029 = vmatmul.mubr.bf16.gmra.mrb[0].mxu0 %v991
        %v1030 = vpop.f32.mrb[0].mxu0
        %v1031 = vadd.f32 0.0, %v1030
        %v1032 = vpop.f32.mrb[0].mxu0
        %v1033 = vpop.f32.mrb[0].mxu0
        %v1034 = vpop.f32.mrb[0].mxu0
        %1035 = vdwg.mxu0
        %v1036 = vmul.f32 %v1031, 0.35355338
        %v1037 = vsel %vm764, %v1036, -inf
        %1038 = vmax.xlane.f32.xlu0 %v1037
        %v1039 = vpop.xlane.xlu0 %1038
        %v1040 = vsub.f32 %v1036, %v1039
        %v1041 = vmul.f32 %v1040, 1.442695
        %v1042 = vpow.pop %v1041
        %v1043 = vsel %vm764, %v1042, 0.0
        %1044 = vadd.xlane.f32.xlu0 %v1043
        %v1045 = vpop.xlane.xlu0 %1044
        %v1046 = vrcp.pop %v1045
        %v1047 = vmul.f32 %v1042, %v1046
        %v1048 = vpack.c.bf16 %v1047, %v1047
        %1049 = vrot.lane.b32.xlu0 %v763, 112
        %v1050 = vpop.permute.xlu0 %1049
        %v1052 = vsel %vm764, %v1048, 0
        %v1055 = vsel %vm827, %v1050, 0
        %1057 = vmatprep.subr.bf16.mxu0 0
        %1058 = vmatpush1.bf16.msra.mxu0 %v1055
        %1059 = vmatprep.subr.bf16.mxu0 0
        %1060 = vmatpush1.bf16.msra.mxu0 0
        %1061 = vmatprep.subr.bf16.mxu0 0
        %1062 = vmatpush1.bf16.msra.mxu0 0
        %1063 = vmatprep.subr.bf16.mxu0 0
        %1064 = vmatpush1.bf16.msra.mxu0 0
        %1065 = vmatprep.subr.bf16.mxu0 0
        %1066 = vmatpush1.bf16.msra.mxu0 0
        %1067 = vmatprep.subr.bf16.mxu0 0
        %1068 = vmatpush1.bf16.msra.mxu0 0
        %1069 = vmatprep.subr.bf16.mxu0 0
        %1070 = vmatpush1.bf16.msra.mxu0 0
        %1071 = vmatprep.subr.bf16.mxu0 0
        %1072 = vmatpush1.bf16.msra.mxu0 0
        %1073 = vmatprep.subr.bf16.mxu0 0
        %1074 = vmatpush1.bf16.msra.mxu0 0
        %1075 = vmatprep.subr.bf16.mxu0 0
        %1076 = vmatpush1.bf16.msra.mxu0 0
        %1077 = vmatprep.subr.bf16.mxu0 0
        %1078 = vmatpush1.bf16.msra.mxu0 0
        %1079 = vmatprep.subr.bf16.mxu0 0
        %1080 = vmatpush1.bf16.msra.mxu0 0
        %1081 = vmatprep.subr.bf16.mxu0 0
        %1082 = vmatpush1.bf16.msra.mxu0 0
        %1083 = vmatprep.subr.bf16.mxu0 0
        %1084 = vmatpush1.bf16.msra.mxu0 0
        %1085 = vmatprep.subr.bf16.mxu0 0
        %1086 = vmatpush1.bf16.msra.mxu0 0
        %1087 = vmatprep.subr.bf16.mxu0 0
        %1088 = vmatpush1.bf16.msra.mxu0 0
        %1089 = vmatprep.mubr.bf16.mxu0 0
        %1090 = vmatmul.mubr.bf16.gmra.mrb[0].mxu0 %v1052
        %v1091 = vpop.f32.mrb[0].mxu0
        %v1092 = vadd.f32 0.0, %v1091
        %v1093 = vpop.f32.mrb[0].mxu0
        %v1094 = vpop.f32.mrb[0].mxu0
        %v1095 = vpop.f32.mrb[0].mxu0
        %1096 = vdwg.mxu0
        %v1097 = vadd.f32 %v985, %v1047
        %1098 = vrot.lane.b32.xlu0 %v761, 104
        %v1099 = vpop.permute.xlu0 %1098
        %1100 = vrot.lane.b32.xlu0 %v762, 104
        %v1101 = vpop.permute.xlu0 %1100
        %v1103 = vsel %vm764, %v1099, 0
        %v1106 = vsel %vm764, %v1101, 0
        %1108 = vmatprep.subr.bf16.mxu0 0
        %1109 = vmatpush1.bf16.xpose.msra.mxu0 %v1106
        %1110 = vmatprep.subr.bf16.mxu0 0
        %1111 = vmatpush1.bf16.xpose.msra.mxu0 0
        %1112 = vmatprep.subr.bf16.mxu0 0
        %1113 = vmatpush1.bf16.xpose.msra.mxu0 0
        %1114 = vmatprep.subr.bf16.mxu0 0
        %1115 = vmatpush1.bf16.xpose.msra.mxu0 0
        %1116 = vmatprep.subr.bf16.mxu0 0
        %1117 = vmatpush1.bf16.xpose.msra.mxu0 0
        %1118 = vmatprep.subr.bf16.mxu0 0
        %1119 = vmatpush1.bf16.xpose.msra.mxu0 0
        %1120 = vmatprep.subr.bf16.mxu0 0
        %1121 = vmatpush1.bf16.xpose.msra.mxu0 0
        %1122 = vmatprep.subr.bf16.mxu0 0
        %1123 = vmatpush1.bf16.xpose.msra.mxu0 0
        %1124 = vmatprep.subr.bf16.mxu0 0
        %1125 = vmatpush1.bf16.xpose.msra.mxu0 0
        %1126 = vmatprep.subr.bf16.mxu0 0
        %1127 = vmatpush1.bf16.xpose.msra.mxu0 0
        %1128 = vmatprep.subr.bf16.mxu0 0
        %1129 = vmatpush1.bf16.xpose.msra.mxu0 0
        %1130 = vmatprep.subr.bf16.mxu0 0
        %1131 = vmatpush1.bf16.xpose.msra.mxu0 0
        %1132 = vmatprep.subr.bf16.mxu0 0
        %1133 = vmatpush1.bf16.xpose.msra.mxu0 0
        %1134 = vmatprep.subr.bf16.mxu0 0
        %1135 = vmatpush1.bf16.xpose.msra.mxu0 0
        %1136 = vmatprep.subr.bf16.mxu0 0
        %1137 = vmatpush1.bf16.xpose.msra.mxu0 0
        %1138 = vmatprep.subr.bf16.mxu0 0
        %1139 = vmatpush1.bf16.xpose.msra.mxu0 0
        %1140 = vmatprep.mubr.bf16.mxu0 0
        %1141 = vmatmul.mubr.bf16.gmra.mrb[0].mxu0 %v1103
        %v1142 = vpop.f32.mrb[0].mxu0
        %v1143 = vadd.f32 0.0, %v1142
        %v1144 = vpop.f32.mrb[0].mxu0
        %v1145 = vpop.f32.mrb[0].mxu0
        %v1146 = vpop.f32.mrb[0].mxu0
        %1147 = vdwg.mxu0
        %v1148 = vmul.f32 %v1143, 0.35355338
        %v1149 = vsel %vm764, %v1148, -inf
        %1150 = vmax.xlane.f32.xlu0 %v1149
        %v1151 = vpop.xlane.xlu0 %1150
        %v1152 = vsub.f32 %v1148, %v1151
        %v1153 = vmul.f32 %v1152, 1.442695
        %v1154 = vpow.pop %v1153
        %v1155 = vsel %vm764, %v1154, 0.0
        %1156 = vadd.xlane.f32.xlu0 %v1155
        %v1157 = vpop.xlane.xlu0 %1156
        %v1158 = vrcp.pop %v1157
        %v1159 = vmul.f32 %v1154, %v1158
        %v1160 = vpack.c.bf16 %v1159, %v1159
        %1161 = vrot.lane.b32.xlu0 %v763, 104
        %v1162 = vpop.permute.xlu0 %1161
        %v1164 = vsel %vm764, %v1160, 0
        %v1167 = vsel %vm827, %v1162, 0
        %1169 = vmatprep.subr.bf16.mxu0 0
        %1170 = vmatpush1.bf16.msra.mxu0 %v1167
        %1171 = vmatprep.subr.bf16.mxu0 0
        %1172 = vmatpush1.bf16.msra.mxu0 0
        %1173 = vmatprep.subr.bf16.mxu0 0
        %1174 = vmatpush1.bf16.msra.mxu0 0
        %1175 = vmatprep.subr.bf16.mxu0 0
        %1176 = vmatpush1.bf16.msra.mxu0 0
        %1177 = vmatprep.subr.bf16.mxu0 0
        %1178 = vmatpush1.bf16.msra.mxu0 0
        %1179 = vmatprep.subr.bf16.mxu0 0
        %1180 = vmatpush1.bf16.msra.mxu0 0
        %1181 = vmatprep.subr.bf16.mxu0 0
        %1182 = vmatpush1.bf16.msra.mxu0 0
        %1183 = vmatprep.subr.bf16.mxu0 0
        %1184 = vmatpush1.bf16.msra.mxu0 0
        %1185 = vmatprep.subr.bf16.mxu0 0
        %1186 = vmatpush1.bf16.msra.mxu0 0
        %1187 = vmatprep.subr.bf16.mxu0 0
        %1188 = vmatpush1.bf16.msra.mxu0 0
        %1189 = vmatprep.subr.bf16.mxu0 0
        %1190 = vmatpush1.bf16.msra.mxu0 0
        %1191 = vmatprep.subr.bf16.mxu0 0
        %1192 = vmatpush1.bf16.msra.mxu0 0
        %1193 = vmatprep.subr.bf16.mxu0 0
        %1194 = vmatpush1.bf16.msra.mxu0 0
        %1195 = vmatprep.subr.bf16.mxu0 0
        %1196 = vmatpush1.bf16.msra.mxu0 0
        %1197 = vmatprep.subr.bf16.mxu0 0
        %1198 = vmatpush1.bf16.msra.mxu0 0
        %1199 = vmatprep.subr.bf16.mxu0 0
        %1200 = vmatpush1.bf16.msra.mxu0 0
        %1201 = vmatprep.mubr.bf16.mxu0 0
        %1202 = vmatmul.mubr.bf16.gmra.mrb[0].mxu0 %v1164
        %v1203 = vpop.f32.mrb[0].mxu0
        %v1204 = vadd.f32 0.0, %v1203
        %v1205 = vpop.f32.mrb[0].mxu0
        %v1206 = vpop.f32.mrb[0].mxu0
        %v1207 = vpop.f32.mrb[0].mxu0
        %1208 = vdwg.mxu0
        %v1209 = vadd.f32 %v1097, %v1159
        %1211 = vrot.lane.b32.xlu0 %v980, 8
        %v1212 = vpop.permute.xlu0 %1211
        %1215 = vrot.lane.b32.xlu0 %v1092, 16
        %v1216 = vpop.permute.xlu0 %1215
        %1219 = vrot.lane.b32.xlu0 %v1204, 24
        %v1220 = vpop.permute.xlu0 %1219
        %v1222 = vsel %vm764, %v866, %v1212
        %vm1223 = vcmask 130048
        %v1224 = vsel %vm1223, %v1222, %v1216
        %vm1225 = vcmask 195584
        %v1226 = vsel %vm1225, %v1224, %v1220
        %v1227 = vpack.c.bf16 %v1226, %v1226
        %v1228 = vld [vmem:[#allocation11] sm:$0xf]
        %v1229 = vld [vmem:[#allocation11 + $0x4] sm:$0xf]
        %v1230 = vld [vmem:[#allocation11 + $0x8] sm:$0xf]
        %v1231 = vld [vmem:[#allocation11 + $0xc] sm:$0xf]
        %v1232 = vld [vmem:[%s10] sm:$0x1]
        %v1234 = vlaneseq
        %v1235 = vshrl.u32 %v1234, 7
        %v1236 = vsub.s32 0, %v1235
        %v1237 = vrot.slane %v1232, %v1236
        %v1243 = vunpack.c.l.b16 %v1228
        %v1244 = vunpack.c.l.b16 %v1229
        %v1245 = vunpack.c.l.b16 %v1230
        %v1246 = vunpack.c.l.b16 %v1231
        %v1247 = vpack.c.b16 %v1244, %v1243
        %v1248 = vpack.c.b16 %v1246, %v1245
        %v1252 = vsel %vm585, %v1227, 0
        %1254 = vmatprep.subr.bf16.mxu0 0
        %1255 = vmatpush1.bf16.msra.mxu0 %v1247
        %1256 = vmatprep.subr.bf16.mxu0 0
        %1257 = vmatpush1.bf16.msra.mxu0 %v1248
        %1258 = vmatprep.subr.bf16.mxu0 0
        %1259 = vmatpush1.bf16.msra.mxu0 0
        %1260 = vmatprep.subr.bf16.mxu0 0
        %1261 = vmatpush1.bf16.msra.mxu0 0
        %1262 = vmatprep.subr.bf16.mxu0 0
        %1263 = vmatpush1.bf16.msra.mxu0 0
        %1264 = vmatprep.subr.bf16.mxu0 0
        %1265 = vmatpush1.bf16.msra.mxu0 0
        %1266 = vmatprep.subr.bf16.mxu0 0
        %1267 = vmatpush1.bf16.msra.mxu0 0
        %1268 = vmatprep.subr.bf16.mxu0 0
        %1269 = vmatpush1.bf16.msra.mxu0 0
        %1270 = vmatprep.subr.bf16.mxu0 0
        %1271 = vmatpush1.bf16.msra.mxu0 0
        %1272 = vmatprep.subr.bf16.mxu0 0
        %1273 = vmatpush1.bf16.msra.mxu0 0
        %1274 = vmatprep.subr.bf16.mxu0 0
        %1275 = vmatpush1.bf16.msra.mxu0 0
        %1276 = vmatprep.subr.bf16.mxu0 0
        %1277 = vmatpush1.bf16.msra.mxu0 0
        %1278 = vmatprep.subr.bf16.mxu0 0
        %1279 = vmatpush1.bf16.msra.mxu0 0
        %1280 = vmatprep.subr.bf16.mxu0 0
        %1281 = vmatpush1.bf16.msra.mxu0 0
        %1282 = vmatprep.subr.bf16.mxu0 0
        %1283 = vmatpush1.bf16.msra.mxu0 0
        %1284 = vmatprep.subr.bf16.mxu0 0
        %1285 = vmatpush1.bf16.msra.mxu0 0
        %1286 = vmatprep.mubr.bf16.mxu0 0
        %1287 = vmatmul.mubr.bf16.gmra.mrb[0].mxu0 %v1252
        %v1288 = vpop.f32.mrb[0].mxu0
        %v1289 = vadd.f32 %v1237, %v1288
        %v1290 = vpop.f32.mrb[0].mxu0
        %v1291 = vpop.f32.mrb[0].mxu0
        %v1292 = vpop.f32.mrb[0].mxu0
        %1293 = vdwg.mxu0
        %1294 = vst.msk [vmem:[%s547] sm:$0xff] %vm585, %v1289
        %v1295 = vmul.f32 %v1209, 0.25
        %1296 = vst.msk [vmem:[%s554] sm:$0xff] %vm764, %v1295
        %s1297 = sand.u32 %s292, 1
        %s1298 = scalar_lea.sflag [#allocation4], %s1297
        %s1299 = sand.u32 %s292, 1
        %s1300 = smul.addr %s1299, 8
        %s1301 = scalar_lea.vmem [#allocation13], %s1300
        %s1302 = sand.u32 %s318, 1
        %s1303 = scalar_lea.sflag [#allocation15], %s1302
        %s1304 = sand.u32 %s318, 1
        %s1305 = smul.addr %s1304, 8
        %s1306 = scalar_lea.vmem [#allocation14], %s1305
        // Predicated region
        $region89: #{tpu_custom_call.1} parent=63 // pred_check
          %p1307 = pneg %p302
        $region90: #{tpu_custom_call.1} parent=63 // pred_check_branch
          %1309 = sbr.rel (%p1307) target = $region92
        $region91: #{tpu_custom_call.1} parent=63 // pred_region
          %s1311 = ssub.s32 128, 128
          %1312 = vsyncadd %s1298, %s1311
          %s1313 = smul.addr %s38, 128
          %s1314 = scalar_lea.hbm %s11, %s1313
          %s1316 = sshll.u32 %s1301, 4
          %s1317 = int_to_ptr.vmem [resolvable:$true] %s1316
          %1319 = dma.vmem_to_hbm [thread:$0]  %s1317, 128, %s1314, %s1298
        $region92: #{tpu_custom_call.1} parent=63 // pred_fallthru
          _
        // Predicated region
        $region93: #{tpu_custom_call.1} parent=63 // pred_check
          %p1320 = pneg %p328
        $region94: #{tpu_custom_call.1} parent=63 // pred_check_branch
          %1322 = sbr.rel (%p1320) target = $region96
        $region95: #{tpu_custom_call.1} parent=63 // pred_region
          %s1324 = ssub.s32 128, 128
          %1325 = vsyncadd %s1303, %s1324
          %s1326 = smul.addr %s38, 128
          %s1327 = scalar_lea.hbm %s12, %s1326
          %s1329 = sshll.u32 %s1306, 4
          %s1330 = int_to_ptr.vmem [resolvable:$true] %s1329
          %1332 = dma.vmem_to_hbm [thread:$0]  %s1330, 128, %s1327, %s1303
        $region96: #{tpu_custom_call.1} parent=63 // pred_fallthru
          _
      $region64: #{tpu_custom_call.1} parent=5 // pred_fallthru
        _
      %p1333 = scmp.le.s32.totalorder 2, %s33
      // Predicated region
      $region97: #{tpu_custom_call.1} parent=5 // pred_check
        %p1334 = pneg %p1333
      $region98: #{tpu_custom_call.1} parent=5 // pred_check_branch
        %1336 = sbr.rel (%p1334) target = $region100
      $region99: #{tpu_custom_call.1} parent=5 // pred_region
        %s1337 = ssub.s32 %s33, 2
        // Predicated region
        $region101: #{tpu_custom_call.1} parent=99 // pred_check
          %p1338 = pneg %p308
        $region102: #{tpu_custom_call.1} parent=99 // pred_check_branch
          %1340 = sbr.rel (%p1338) target = $region104
        $region103: #{tpu_custom_call.1} parent=99 // pred_region
          %s1341 = sand.u32 %s293, 1
          %s1342 = scalar_lea.sflag [#allocation4], %s1341
          %s1343 = sand.u32 %s293, 1
          %s1344 = smul.addr %s1343, 8
          %s1345 = scalar_lea.vmem [#allocation13], %s1344
          %1346 = dma.done %s1342, 128
        $region104: #{tpu_custom_call.1} parent=99 // pred_fallthru
          _
        // Predicated region
        $region105: #{tpu_custom_call.1} parent=99 // pred_check
          %p1347 = pneg %p334
        $region106: #{tpu_custom_call.1} parent=99 // pred_check_branch
          %1349 = sbr.rel (%p1347) target = $region108
        $region107: #{tpu_custom_call.1} parent=99 // pred_region
          %s1350 = sand.u32 %s319, 1
          %s1351 = scalar_lea.sflag [#allocation15], %s1350
          %s1352 = sand.u32 %s319, 1
          %s1353 = smul.addr %s1352, 8
          %s1354 = scalar_lea.vmem [#allocation14], %s1353
          %1355 = dma.done %s1351, 128
        $region108: #{tpu_custom_call.1} parent=99 // pred_fallthru
          _
      $region100: #{tpu_custom_call.1} parent=5 // pred_fallthru
        _
    $region6: #{tpu_custom_call.1} parent=1 // loop_footer
      %s37 = sadd.s32 1, %s33
    $region7: #{tpu_custom_call.1} parent=1 // loop_footer_branch
      %32 = sbr.rel target = $region3
    $region8: #{tpu_custom_call.1} parent=1 // loop_exit
      _
    %1356 = vsyncpa [#allocation3], 1
    %s1357 = scalar_lea.sflag [#allocation3], 1
    %1358 = vsyncpa %s1357, 1
    %1359 = vsyncpa [#allocation6], 1
    %s1360 = scalar_lea.sflag [#allocation6], 1
    %1361 = vsyncpa %s1360, 1
    %1362 = vsyncpa [#allocation9], 1
    %1363 = vsyncpa [#allocation12], 1
    %1364 = vsyncpa [#allocation4], 1
    %s1365 = scalar_lea.sflag [#allocation4], 1
    %1366 = vsyncpa %s1365, 1
    %1367 = vsyncpa [#allocation15], 1
    %s1368 = scalar_lea.sflag [#allocation15], 1
    %1369 = vsyncpa %s1368, 1

</llo_original>
